<compile_context>
chip_gen: v5e
topology: v5e:2x2
jax: 0.10.0
libtpu: 0.0.40
codegen_flags: <defaults>
</compile_context>

<pallas_src>
import functools
import numpy as np
import jax
import jax.numpy as jnp
from jax.experimental import pallas as pl
from jax.experimental.pallas import tpu as pltpu

VOCAB = 50                         # vocab_size
EMB = 24                           # embedding_dim
HID = 32                           # hidden_dim
NS = 4                             # streams: obs, look, inv, act
HF = NS * HID                      # fused hidden width (128 lanes, lane-dense)
GF = 3 * HF                        # fused gate width r|z|n (384 = 3 x 128)
KP = 256                           # stream-concatenated vocab 4*V=200 -> 256


# ---------------------------------------------------------------------------
# Fused Pallas kernel: 4x GRU (lane-batched) + state_encoder + hidden/ReLU +
# act_scorer, all in one pallas_call.
# ---------------------------------------------------------------------------

def _fused_kernel_factory(l_max, np_rows):
    unroll_steps = l_max <= 16       # past ~16 steps, avoid vreg spills

    def kernel(ids_ref, lens_ref, sel_ref, wx_ref, whh_ref, bh_ref,
               wtwo_ref, consts_ref, q_ref, xproj_ref):
        rows = l_max * np_rows

        # ---- hoisted fused input projection --------------------------------
        # 4-hot over the stream-concatenated vocab: each row/timestep has one
        # hot entry per stream; the [KP, GF] matrix folds embedding + W_ih +
        # b_ih for every stream into disjoint lane blocks, so a single MXU
        # matmul produces all gate inputs for all streams and all timesteps.
        iota = jax.lax.broadcasted_iota(jnp.int32, (rows, KP), 1)
        mh = ((ids_ref[0] == iota).astype(jnp.float32)
              + (ids_ref[1] == iota).astype(jnp.float32)
              + (ids_ref[2] == iota).astype(jnp.float32)
              + (ids_ref[3] == iota).astype(jnp.float32))
        xproj_ref[...] = jnp.dot(mh, wx_ref[...],
                                 preferred_element_type=jnp.float32)  # [rows,GF]

        whh = whh_ref[...]                                    # [HF, GF] blockdiag
        bh = jnp.broadcast_to(bh_ref[...], (np_rows, GF))     # hoisted bias bcast
        lens = lens_ref[...]                                  # [NP, HF] int32

        def step(t, h, xp):
            # One lane-dense recurrent matmul for all 4 streams.
            hp = jnp.dot(h, whh, preferred_element_type=jnp.float32) + bh
            r = jax.nn.sigmoid(xp[:, 0:HF] + hp[:, 0:HF])
            z = jax.nn.sigmoid(xp[:, HF:2 * HF] + hp[:, HF:2 * HF])
            n = jnp.tanh(xp[:, 2 * HF:3 * HF] + r * hp[:, 2 * HF:3 * HF])
            h_new = (1.0 - z) * n + z * h
            # Freeze lanes whose (per-stream, per-row) sequence already ended.
            return jnp.where(lens > t, h_new, h)

        h0 = jnp.zeros((np_rows, HF), jnp.float32)
        if unroll_steps:
            h = h0
            for t in range(l_max):                 # fully unrolled, static slices
                h = step(t, h, xproj_ref[t * np_rows:(t + 1) * np_rows, :])
        else:
            def body(t, h):
                start = pl.multiple_of(t * np_rows, np_rows)
                return step(t, h, xproj_ref[pl.ds(start, np_rows), :])
            h = jax.lax.fori_loop(0, l_max, body, h0)

        # ---- fused MLP head -------------------------------------------------
        # wtwo = [ Wse_big @ W_hidden_state.T  |  W_hidden_act_big ]  (128 x 64)
        # folds state_encoder + the state/act halves of `hidden` into one matmul
        # on the lane-concatenated h.
        proj = jnp.dot(h, wtwo_ref[...], preferred_element_type=jnp.float32)
        hs_proj = proj[:, 0:HID]                    # state path (pre-select)
        a_proj = proj[:, HID:2 * HID]               # action path
        # Per-action state replication via one-hot select matmul.
        # TODO(synk): swap for a scalar-prefetch (SMEM rep_idx) gather once
        # admissible-action rows grow into the hundreds; at NP=8 this is free.
        state_rep = jnp.dot(sel_ref[...], hs_proj,
                            preferred_element_type=jnp.float32)
        b1 = consts_ref[0:1, :]                     # b_se @ W_h_state.T + b_h
        w2 = consts_ref[1:2, :]                     # act_scorer weight row
        b2 = consts_ref[2:3, 0:1]                   # act_scorer bias
        z1 = jnp.maximum(state_rep + a_proj + b1, 0.0)
        # act_scorer: VPU multiply + lane reduce (no lane-sparse [H,1] matmul).
        q_ref[...] = jnp.sum(z1 * w2, axis=-1, keepdims=True) + b2

    return kernel


@functools.lru_cache(maxsize=None)
def _build_drrn_call(l_max, np_rows):
    kernel = _fused_kernel_factory(l_max, np_rows)
    vmem = pl.BlockSpec(memory_space=pltpu.MemorySpace.VMEM)
    call = pl.pallas_call(
        kernel,
        out_shape=jax.ShapeDtypeStruct((np_rows, 1), jnp.float32),
        in_specs=[vmem] * 8,
        out_specs=vmem,
        scratch_shapes=[pltpu.VMEM((l_max * np_rows, GF), jnp.float32)],
        # Grid-less single invocation: weights + activations are well under
        # 1 MiB, so no re-tiling / extra pipelining on any generation (incl.
        # v7x's 64 MiB VMEM).  If batch/action rows grow past ~256, add a
        # leading row-tile grid axis with dimension_semantics=("parallel",)
        # to shard across v7x's two TensorCores.
    )
    return jax.jit(call)


# ---------------------------------------------------------------------------
# Parameter init (PyTorch-layout raw params) and one-time weight fusion
# ---------------------------------------------------------------------------

def init_gru_raw(key, E, H):
    ks = jax.random.split(key, 4)
    s = 1.0 / np.sqrt(H)
    w_ih = jax.random.uniform(ks[0], (3 * H, E), jnp.float32, -s, s)   # [r;z;n]
    w_hh = jax.random.uniform(ks[1], (3 * H, H), jnp.float32, -s, s)
    b_ih = jax.random.uniform(ks[2], (3 * H,), jnp.float32, -s, s)
    b_hh = jax.random.uniform(ks[3], (3 * H,), jnp.float32, -s, s)
    return (w_ih, w_hh, b_ih, b_hh)


def init_linear(key, fan_out, fan_in):
    ks = jax.random.split(key, 2)
    s = 1.0 / np.sqrt(fan_in)
    w = jax.random.uniform(ks[0], (fan_out, fan_in), jnp.float32, -s, s)
    b = jax.random.uniform(ks[1], (fan_out,), jnp.float32, -s, s)
    return (w, b)


def init_params(key):
    ks = jax.random.split(key, 8)
    return dict(
        emb=jax.random.normal(ks[0], (VOCAB, EMB), jnp.float32),
        obs_gru=init_gru_raw(ks[1], EMB, HID),
        look_gru=init_gru_raw(ks[2], EMB, HID),
        inv_gru=init_gru_raw(ks[3], EMB, HID),
        act_gru=init_gru_raw(ks[4], EMB, HID),
        state_enc=init_linear(ks[5], HID, 3 * HID),
        hidden=init_linear(ks[6], HID, 2 * HID),
        scorer=init_linear(ks[7], 1, HID),
    )


def prepare_fused_params(params):
    """Init-time weight fusion / re-layout (all host-side numpy, done once).

    * wx_big  [KP, GF]: 4-stream concatenated-vocab input projection; row
      s*V+v, gate g, lanes [g*HF + s*H : g*HF + (s+1)*H] = emb[v] @ W_ih_s[g].T
      + b_ih_s[g]   (embedding + input weight + input bias folded).
    * whh_big [HF, GF]: block-diagonal recurrent weight (exact zeros off-block,
      so the fused matmul reproduces the per-stream GRU bit-exactly).
    * bh_big  [1, GF]: recurrent bias (kept separate: b_hn must stay inside
      the reset-gate multiply, so it cannot be folded into wx).
    * wtwo    [HF, 2H]: [ Wse_big @ W_hidden_state.T | W_hidden_act_big ]
      (state_encoder composed with the state half of `hidden`; act half of
      `hidden` lifted to the fused-lane layout).
    * consts  [3, H]: row0 = b_se @ W_hidden_state.T + b_hidden,
                      row1 = act_scorer weight, consts[2,0] = act_scorer bias.
    """
    H, V = HID, VOCAB
    emb = np.asarray(params['emb'], np.float32)
    wx_big = np.zeros((KP, GF), np.float32)
    whh_big = np.zeros((HF, GF), np.float32)
    bh_big = np.zeros((1, GF), np.float32)
    for s, name in enumerate(('obs_gru', 'look_gru', 'inv_gru', 'act_gru')):
        w_ih, w_hh, b_ih, b_hh = [np.asarray(a, np.float32) for a in params[name]]
        xw = emb @ w_ih.T + b_ih[None, :]                         # [V, 3H]
        for g in range(3):
            lo, hi = g * HF + s * H, g * HF + (s + 1) * H
            wx_big[s * V:(s + 1) * V, lo:hi] = xw[:, g * H:(g + 1) * H]
            whh_big[s * H:(s + 1) * H, lo:hi] = w_hh[g * H:(g + 1) * H, :].T
            bh_big[0, lo:hi] = b_hh[g * H:(g + 1) * H]

    w_se, b_se = [np.asarray(a, np.float32) for a in params['state_enc']]  # [H,3H],[H]
    w_h, b_h = [np.asarray(a, np.float32) for a in params['hidden']]       # [H,2H],[H]
    w_s, b_s = [np.asarray(a, np.float32) for a in params['scorer']]       # [1,H],[1]

    wse_big = np.zeros((HF, H), np.float32)
    wse_big[0:3 * H, :] = w_se.T                     # obs|look|inv lanes; act lanes 0
    w1s_T = w_h[:, :H].T                             # [H, H] state half of `hidden`
    w1a_big = np.zeros((HF, H), np.float32)
    w1a_big[3 * H:4 * H, :] = w_h[:, H:].T           # act lanes only
    wtwo = np.concatenate([wse_big @ w1s_T, w1a_big], axis=1)     # [HF, 2H]

    consts = np.zeros((3, H), np.float32)
    consts[0] = (b_se[None, :] @ w1s_T + b_h[None, :])[0]
    consts[1] = w_s[0]
    consts[2, 0] = float(b_s[0])

    return dict(wx=jnp.asarray(wx_big), whh=jnp.asarray(whh_big),
                bh=jnp.asarray(bh_big), wtwo=jnp.asarray(wtwo),
                consts=jnp.asarray(consts))


# ---------------------------------------------------------------------------
# Host-side glue (ragged padding / bucketing / split by act_sizes)
# ---------------------------------------------------------------------------

def _round_up(x, m):
    return ((x + m - 1) // m) * m


def drrn_forward(state_batch, act_batch, fused):
    obs = [s[0] for s in state_batch]
    look = [s[1] for s in state_batch]
    inv = [s[2] for s in state_batch]
    act_sizes = [len(a) for a in act_batch]
    flat_acts = [seq for acts in act_batch for seq in acts]
    streams = (obs, look, inv, flat_acts)

    B = len(state_batch)
    N = len(flat_acts)
    np_rows = max(8, _round_up(max(B, N), 8))                     # sublane bucket
    l_max = max(4, _round_up(max(len(q) for st in streams for q in st), 4))

    ids = np.zeros((NS, l_max, np_rows), np.int32)                # time-major
    lens_full = np.zeros((np_rows, HF), np.int32)                 # pre-broadcast
    for s, st in enumerate(streams):
        for i, seq in enumerate(st):
            ids[s, :len(seq), i] = seq
            lens_full[i, s * HID:(s + 1) * HID] = len(seq)
        ids[s] += s * VOCAB                # offset into concatenated vocab
    ids = ids.reshape(NS, l_max * np_rows, 1)

    rep_idx = np.repeat(np.arange(B), act_sizes)
    sel = np.zeros((np_rows, np_rows), np.float32)                # one-hot repeat
    sel[np.arange(N), rep_idx] = 1.0

    call = _build_drrn_call(l_max, np_rows)
    q = call(jnp.asarray(ids), jnp.asarray(lens_full), jnp.asarray(sel),
             fused['wx'], fused['whh'], fused['bh'],
             fused['wtwo'], fused['consts'])
    q = jax.block_until_ready(q)
    q_host = np.asarray(q)[:N, 0]         # single D2H transfer; split in numpy
    out, now = [], 0
    for j in act_sizes:                   # torch .split(act_sizes)
        out.append(q_host[now:now + j])
        now += j
    return out


# ---------------------------------------------------------------------------
# Pure-JAX reference (raw PyTorch-layout params) for correctness check
# ---------------------------------------------------------------------------

def _pad_time_major(seqs):
    L = max(len(s) for s in seqs)
    B = len(seqs)
    ids = np.zeros((L, B), np.int32)
    lens = np.zeros((B, 1), np.int32)
    for i, s in enumerate(seqs):
        ids[:len(s), i] = s
        lens[i, 0] = len(s)
    return jnp.asarray(ids), jnp.asarray(lens)


def _gru_last_ref(x, lens, raw):
    w_ih, w_hh, b_ih, b_hh = raw
    H = w_hh.shape[1]
    L, B, _ = x.shape
    h = jnp.zeros((B, H), jnp.float32)
    for t in range(L):
        gi = x[t] @ w_ih.T + b_ih
        gh = h @ w_hh.T + b_hh
        r = jax.nn.sigmoid(gi[:, :H] + gh[:, :H])
        z = jax.nn.sigmoid(gi[:, H:2 * H] + gh[:, H:2 * H])
        n = jnp.tanh(gi[:, 2 * H:] + r * gh[:, 2 * H:])
        h_new = (1.0 - z) * n + z * h
        mask = (t < lens).astype(jnp.float32)
        h = mask * h_new + (1.0 - mask) * h
    return h


def drrn_forward_ref(state_batch, act_batch, params):
    def enc(seqs, raw):
        ids, lens = _pad_time_major(seqs)
        return _gru_last_ref(jnp.take(params['emb'], ids, axis=0), lens, raw)
    obs_out = enc([s[0] for s in state_batch], params['obs_gru'])
    look_out = enc([s[1] for s in state_batch], params['look_gru'])
    inv_out = enc([s[2] for s in state_batch], params['inv_gru'])
    w_se, b_se = params['state_enc']
    state_out = jnp.concatenate([obs_out, look_out, inv_out], 1) @ w_se.T + b_se
    act_sizes = [len(a) for a in act_batch]
    act_out = enc([seq for acts in act_batch for seq in acts], params['act_gru'])
    rep_idx = jnp.asarray(np.repeat(np.arange(len(state_batch)), act_sizes))
    s_rep = jnp.take(state_out, rep_idx, axis=0)
    w_h, b_h = params['hidden']
    w_s, b_s = params['scorer']
    z = jnp.maximum(jnp.concatenate([s_rep, act_out], 1) @ w_h.T + b_h, 0.0)
    return (z @ w_s.T + b_s)[:, 0]


# ---------------------------------------------------------------------------

def _make_seq(key, length):
    return np.asarray(jax.random.randint(key, (length,), 1, VOCAB), np.int32).tolist()


def _check(state_batch, act_batch, fused, params):
    q_values = drrn_forward(state_batch, act_batch, fused)
    q_flat = np.concatenate([np.asarray(q) for q in q_values])
    q_ref = np.asarray(jax.block_until_ready(
        drrn_forward_ref(state_batch, act_batch, params)))
    n_acts = sum(len(a) for a in act_batch)
    assert q_flat.shape == (n_acts,)
    np.testing.assert_allclose(q_flat, q_ref, rtol=1e-4, atol=1e-4)


if __name__ == "__main__":
    root = jax.random.PRNGKey(0)
    pkey, dkey = jax.random.split(root)
    params = init_params(pkey)
    fused = prepare_fused_params(params)

    keys = jax.random.split(dkey, 24)

    # --- test 1: short sequences (fully-unrolled recurrence path) -----------
    state_batch = [
        (_make_seq(keys[0], 7), _make_seq(keys[1], 4), _make_seq(keys[2], 3)),
        (_make_seq(keys[3], 5), _make_seq(keys[4], 6), _make_seq(keys[5], 4)),
    ]
    act_batch = [
        [_make_seq(keys[6], 2), _make_seq(keys[7], 4), _make_seq(keys[8], 3)],
        [_make_seq(keys[9], 3), _make_seq(keys[10], 2)],
    ]
    _check(state_batch, act_batch, fused, params)

    # --- test 2: longer sequences (VMEM-staged xproj + fori_loop path) ------
    state_batch2 = [
        (_make_seq(keys[11], 19), _make_seq(keys[12], 11), _make_seq(keys[13], 5)),
        (_make_seq(keys[14], 14), _make_seq(keys[15], 8), _make_seq(keys[16], 6)),
    ]
    act_batch2 = [
        [_make_seq(keys[17], 6), _make_seq(keys[18], 3)],
        [_make_seq(keys[19], 9), _make_seq(keys[20], 7)],
    ]
    _check(state_batch2, act_batch2, fused, params)

    print("KERNEL_OK")
</pallas_src>

<mosaic_0001>
module attributes {stable_mosaic.version = 11 : i64} {
  func.func @kernel(%arg0: memref<4x64x1xi32, #tpu.memory_space<vmem>>, %arg1: memref<8x128xi32, #tpu.memory_space<vmem>>, %arg2: memref<8x8xf32, #tpu.memory_space<vmem>>, %arg3: memref<256x384xf32, #tpu.memory_space<vmem>>, %arg4: memref<128x384xf32, #tpu.memory_space<vmem>>, %arg5: memref<1x384xf32, #tpu.memory_space<vmem>>, %arg6: memref<128x64xf32, #tpu.memory_space<vmem>>, %arg7: memref<3x32xf32, #tpu.memory_space<vmem>>, %arg8: memref<8x1xf32, #tpu.memory_space<vmem>>, %arg9: memref<64x384xf32, #tpu.memory_space<vmem>>) attributes {dimension_semantics = [], scalar_prefetch = 0 : i64, scratch_operands = 1 : i64, tpu.core_type = #tpu.core_type<tc>} {
    %0 = tpu.iota {dimensions = array<i32: 1>} : vector<64x256xi32>
    %c0 = arith.constant 0 : index
    %c0_0 = arith.constant 0 : index
    %c0_1 = arith.constant 0 : index
    %1 = vector.load %arg0[%c0, %c0_0, %c0_1] : memref<4x64x1xi32, #tpu.memory_space<vmem>>, vector<1x64x1xi32>
    %2 = vector.shape_cast %1 : vector<1x64x1xi32> to vector<64x1xi32>
    %3 = vector.broadcast %2 : vector<64x1xi32> to vector<64x256xi32>
    %4 = arith.cmpi eq, %3, %0 : vector<64x256xi32>
    %5 = arith.extui %4 : vector<64x256xi1> to vector<64x256xi32>
    %6 = arith.sitofp %5 : vector<64x256xi32> to vector<64x256xf32>
    %c1 = arith.constant 1 : index
    %c0_2 = arith.constant 0 : index
    %c0_3 = arith.constant 0 : index
    %7 = vector.load %arg0[%c1, %c0_2, %c0_3] : memref<4x64x1xi32, #tpu.memory_space<vmem>>, vector<1x64x1xi32>
    %8 = vector.shape_cast %7 : vector<1x64x1xi32> to vector<64x1xi32>
    %9 = vector.broadcast %8 : vector<64x1xi32> to vector<64x256xi32>
    %10 = arith.cmpi eq, %9, %0 : vector<64x256xi32>
    %11 = arith.extui %10 : vector<64x256xi1> to vector<64x256xi32>
    %12 = arith.sitofp %11 : vector<64x256xi32> to vector<64x256xf32>
    %13 = arith.addf %6, %12 : vector<64x256xf32>
    %c2 = arith.constant 2 : index
    %c0_4 = arith.constant 0 : index
    %c0_5 = arith.constant 0 : index
    %14 = vector.load %arg0[%c2, %c0_4, %c0_5] : memref<4x64x1xi32, #tpu.memory_space<vmem>>, vector<1x64x1xi32>
    %15 = vector.shape_cast %14 : vector<1x64x1xi32> to vector<64x1xi32>
    %16 = vector.broadcast %15 : vector<64x1xi32> to vector<64x256xi32>
    %17 = arith.cmpi eq, %16, %0 : vector<64x256xi32>
    %18 = arith.extui %17 : vector<64x256xi1> to vector<64x256xi32>
    %19 = arith.sitofp %18 : vector<64x256xi32> to vector<64x256xf32>
    %20 = arith.addf %13, %19 : vector<64x256xf32>
    %c3 = arith.constant 3 : index
    %c0_6 = arith.constant 0 : index
    %c0_7 = arith.constant 0 : index
    %21 = vector.load %arg0[%c3, %c0_6, %c0_7] : memref<4x64x1xi32, #tpu.memory_space<vmem>>, vector<1x64x1xi32>
    %22 = vector.shape_cast %21 : vector<1x64x1xi32> to vector<64x1xi32>
    %23 = vector.broadcast %22 : vector<64x1xi32> to vector<64x256xi32>
    %24 = arith.cmpi eq, %23, %0 : vector<64x256xi32>
    %25 = arith.extui %24 : vector<64x256xi1> to vector<64x256xi32>
    %26 = arith.sitofp %25 : vector<64x256xi32> to vector<64x256xf32>
    %27 = arith.addf %20, %26 : vector<64x256xf32>
    %c0_8 = arith.constant 0 : index
    %c0_9 = arith.constant 0 : index
    %28 = vector.load %arg3[%c0_8, %c0_9] : memref<256x384xf32, #tpu.memory_space<vmem>>, vector<256x384xf32>
    %cst = arith.constant dense<0.000000e+00> : vector<64x384xf32>
    %29 = tpu.matmul %27, %28, %cst {dimension_numbers = #tpu.dot_dimension_numbers<[1], [0], [0], [1], [0, 0, 1, 1], [], []>} : vector<64x256xf32>, vector<256x384xf32>, vector<64x384xf32> -> vector<64x384xf32>
    %c0_10 = arith.constant 0 : index
    %c0_11 = arith.constant 0 : index
    %30 = vector.load %arg9[%c0_10, %c0_11] : memref<64x384xf32, #tpu.memory_space<vmem>>, vector<64x384xf32>
    tpu.vector_store %arg9[%c0_10, %c0_11], %29 {strides = array<i32>} : memref<64x384xf32, #tpu.memory_space<vmem>>, vector<64x384xf32>,
    %c0_12 = arith.constant 0 : index
    %c0_13 = arith.constant 0 : index
    %31 = vector.load %arg4[%c0_12, %c0_13] : memref<128x384xf32, #tpu.memory_space<vmem>>, vector<128x384xf32>
    %c0_14 = arith.constant 0 : index
    %c0_15 = arith.constant 0 : index
    %32 = vector.load %arg5[%c0_14, %c0_15] : memref<1x384xf32, #tpu.memory_space<vmem>>, vector<1x384xf32>
    %33 = vector.shape_cast %32 : vector<1x384xf32> to vector<1x384xf32>
    %34 = vector.broadcast %33 : vector<1x384xf32> to vector<8x384xf32>
    %c0_16 = arith.constant 0 : index
    %c0_17 = arith.constant 0 : index
    %35 = vector.load %arg1[%c0_16, %c0_17] : memref<8x128xi32, #tpu.memory_space<vmem>>, vector<8x128xi32>
    %cst_18 = arith.constant 0.000000e+00 : f32
    %36 = vector.broadcast %cst_18 : f32 to vector<8x128xf32>
    %c0_19 = arith.constant 0 : index
    %c0_20 = arith.constant 0 : index
    %37 = vector.load %arg9[%c0_19, %c0_20] : memref<64x384xf32, #tpu.memory_space<vmem>>, vector<8x384xf32>
    %cst_21 = arith.constant dense<0.000000e+00> : vector<8x384xf32>
    %38 = tpu.matmul %36, %31, %cst_21 {dimension_numbers = #tpu.dot_dimension_numbers<[1], [0], [0], [1], [0, 0, 1, 1], [], []>} : vector<8x128xf32>, vector<128x384xf32>, vector<8x384xf32> -> vector<8x384xf32>
    %39 = arith.addf %38, %34 : vector<8x384xf32>
    %40 = vector.extract_strided_slice %37 {offsets = [0, 0], sizes = [8, 128], strides = [1, 1]} : vector<8x384xf32> to vector<8x128xf32>
    %41 = vector.extract_strided_slice %39 {offsets = [0, 0], sizes = [8, 128], strides = [1, 1]} : vector<8x384xf32> to vector<8x128xf32>
    %42 = arith.addf %40, %41 : vector<8x128xf32>
    %43 = arith.negf %42 : vector<8x128xf32>
    %44 = math.exp %43 : vector<8x128xf32>
    %cst_22 = arith.constant 1.000000e+00 : f32
    %45 = vector.broadcast %cst_22 : f32 to vector<8x128xf32>
    %46 = arith.addf %45, %44 : vector<8x128xf32>
    %47 = arith.divf %45, %46 : vector<8x128xf32>
    %48 = vector.extract_strided_slice %37 {offsets = [0, 128], sizes = [8, 128], strides = [1, 1]} : vector<8x384xf32> to vector<8x128xf32>
    %49 = vector.extract_strided_slice %39 {offsets = [0, 128], sizes = [8, 128], strides = [1, 1]} : vector<8x384xf32> to vector<8x128xf32>
    %50 = arith.addf %48, %49 : vector<8x128xf32>
    %51 = arith.negf %50 : vector<8x128xf32>
    %52 = math.exp %51 : vector<8x128xf32>
    %cst_23 = arith.constant 1.000000e+00 : f32
    %53 = vector.broadcast %cst_23 : f32 to vector<8x128xf32>
    %54 = arith.addf %53, %52 : vector<8x128xf32>
    %55 = arith.divf %53, %54 : vector<8x128xf32>
    %56 = vector.extract_strided_slice %37 {offsets = [0, 256], sizes = [8, 128], strides = [1, 1]} : vector<8x384xf32> to vector<8x128xf32>
    %57 = vector.extract_strided_slice %39 {offsets = [0, 256], sizes = [8, 128], strides = [1, 1]} : vector<8x384xf32> to vector<8x128xf32>
    %58 = arith.mulf %47, %57 : vector<8x128xf32>
    %59 = arith.addf %56, %58 : vector<8x128xf32>
    %60 = math.tanh %59 : vector<8x128xf32>
    %cst_24 = arith.constant 1.000000e+00 : f32
    %61 = vector.broadcast %cst_24 : f32 to vector<8x128xf32>
    %62 = arith.subf %61, %55 : vector<8x128xf32>
    %63 = arith.mulf %62, %60 : vector<8x128xf32>
    %64 = arith.mulf %55, %36 : vector<8x128xf32>
    %65 = arith.addf %63, %64 : vector<8x128xf32>
    %c0_i32 = arith.constant 0 : i32
    %66 = vector.broadcast %c0_i32 : i32 to vector<8x128xi32>
    %67 = arith.cmpi sgt, %35, %66 : vector<8x128xi32>
    %68 = arith.select %67, %65, %36 : vector<8x128xi1>, vector<8x128xf32>
    %c8 = arith.constant 8 : index
    %c0_25 = arith.constant 0 : index
    %69 = vector.load %arg9[%c8, %c0_25] : memref<64x384xf32, #tpu.memory_space<vmem>>, vector<8x384xf32>
    %cst_26 = arith.constant dense<0.000000e+00> : vector<8x384xf32>
    %70 = tpu.matmul %68, %31, %cst_26 {dimension_numbers = #tpu.dot_dimension_numbers<[1], [0], [0], [1], [0, 0, 1, 1], [], []>} : vector<8x128xf32>, vector<128x384xf32>, vector<8x384xf32> -> vector<8x384xf32>
    %71 = arith.addf %70, %34 : vector<8x384xf32>
    %72 = vector.extract_strided_slice %69 {offsets = [0, 0], sizes = [8, 128], strides = [1, 1]} : vector<8x384xf32> to vector<8x128xf32>
    %73 = vector.extract_strided_slice %71 {offsets = [0, 0], sizes = [8, 128], strides = [1, 1]} : vector<8x384xf32> to vector<8x128xf32>
    %74 = arith.addf %72, %73 : vector<8x128xf32>
    %75 = arith.negf %74 : vector<8x128xf32>
    %76 = math.exp %75 : vector<8x128xf32>
    %cst_27 = arith.constant 1.000000e+00 : f32
    %77 = vector.broadcast %cst_27 : f32 to vector<8x128xf32>
    %78 = arith.addf %77, %76 : vector<8x128xf32>
    %79 = arith.divf %77, %78 : vector<8x128xf32>
    %80 = vector.extract_strided_slice %69 {offsets = [0, 128], sizes = [8, 128], strides = [1, 1]} : vector<8x384xf32> to vector<8x128xf32>
    %81 = vector.extract_strided_slice %71 {offsets = [0, 128], sizes = [8, 128], strides = [1, 1]} : vector<8x384xf32> to vector<8x128xf32>
    %82 = arith.addf %80, %81 : vector<8x128xf32>
    %83 = arith.negf %82 : vector<8x128xf32>
    %84 = math.exp %83 : vector<8x128xf32>
    %cst_28 = arith.constant 1.000000e+00 : f32
    %85 = vector.broadcast %cst_28 : f32 to vector<8x128xf32>
    %86 = arith.addf %85, %84 : vector<8x128xf32>
    %87 = arith.divf %85, %86 : vector<8x128xf32>
    %88 = vector.extract_strided_slice %69 {offsets = [0, 256], sizes = [8, 128], strides = [1, 1]} : vector<8x384xf32> to vector<8x128xf32>
    %89 = vector.extract_strided_slice %71 {offsets = [0, 256], sizes = [8, 128], strides = [1, 1]} : vector<8x384xf32> to vector<8x128xf32>
    %90 = arith.mulf %79, %89 : vector<8x128xf32>
    %91 = arith.addf %88, %90 : vector<8x128xf32>
    %92 = math.tanh %91 : vector<8x128xf32>
    %cst_29 = arith.constant 1.000000e+00 : f32
    %93 = vector.broadcast %cst_29 : f32 to vector<8x128xf32>
    %94 = arith.subf %93, %87 : vector<8x128xf32>
    %95 = arith.mulf %94, %92 : vector<8x128xf32>
    %96 = arith.mulf %87, %68 : vector<8x128xf32>
    %97 = arith.addf %95, %96 : vector<8x128xf32>
    %c1_i32 = arith.constant 1 : i32
    %98 = vector.broadcast %c1_i32 : i32 to vector<8x128xi32>
    %99 = arith.cmpi sgt, %35, %98 : vector<8x128xi32>
    %100 = arith.select %99, %97, %68 : vector<8x128xi1>, vector<8x128xf32>
    %c16 = arith.constant 16 : index
    %c0_30 = arith.constant 0 : index
    %101 = vector.load %arg9[%c16, %c0_30] : memref<64x384xf32, #tpu.memory_space<vmem>>, vector<8x384xf32>
    %cst_31 = arith.constant dense<0.000000e+00> : vector<8x384xf32>
    %102 = tpu.matmul %100, %31, %cst_31 {dimension_numbers = #tpu.dot_dimension_numbers<[1], [0], [0], [1], [0, 0, 1, 1], [], []>} : vector<8x128xf32>, vector<128x384xf32>, vector<8x384xf32> -> vector<8x384xf32>
    %103 = arith.addf %102, %34 : vector<8x384xf32>
    %104 = vector.extract_strided_slice %101 {offsets = [0, 0], sizes = [8, 128], strides = [1, 1]} : vector<8x384xf32> to vector<8x128xf32>
    %105 = vector.extract_strided_slice %103 {offsets = [0, 0], sizes = [8, 128], strides = [1, 1]} : vector<8x384xf32> to vector<8x128xf32>
    %106 = arith.addf %104, %105 : vector<8x128xf32>
    %107 = arith.negf %106 : vector<8x128xf32>
    %108 = math.exp %107 : vector<8x128xf32>
    %cst_32 = arith.constant 1.000000e+00 : f32
    %109 = vector.broadcast %cst_32 : f32 to vector<8x128xf32>
    %110 = arith.addf %109, %108 : vector<8x128xf32>
    %111 = arith.divf %109, %110 : vector<8x128xf32>
    %112 = vector.extract_strided_slice %101 {offsets = [0, 128], sizes = [8, 128], strides = [1, 1]} : vector<8x384xf32> to vector<8x128xf32>
    %113 = vector.extract_strided_slice %103 {offsets = [0, 128], sizes = [8, 128], strides = [1, 1]} : vector<8x384xf32> to vector<8x128xf32>
    %114 = arith.addf %112, %113 : vector<8x128xf32>
    %115 = arith.negf %114 : vector<8x128xf32>
    %116 = math.exp %115 : vector<8x128xf32>
    %cst_33 = arith.constant 1.000000e+00 : f32
    %117 = vector.broadcast %cst_33 : f32 to vector<8x128xf32>
    %118 = arith.addf %117, %116 : vector<8x128xf32>
    %119 = arith.divf %117, %118 : vector<8x128xf32>
    %120 = vector.extract_strided_slice %101 {offsets = [0, 256], sizes = [8, 128], strides = [1, 1]} : vector<8x384xf32> to vector<8x128xf32>
    %121 = vector.extract_strided_slice %103 {offsets = [0, 256], sizes = [8, 128], strides = [1, 1]} : vector<8x384xf32> to vector<8x128xf32>
    %122 = arith.mulf %111, %121 : vector<8x128xf32>
    %123 = arith.addf %120, %122 : vector<8x128xf32>
    %124 = math.tanh %123 : vector<8x128xf32>
    %cst_34 = arith.constant 1.000000e+00 : f32
    %125 = vector.broadcast %cst_34 : f32 to vector<8x128xf32>
    %126 = arith.subf %125, %119 : vector<8x128xf32>
    %127 = arith.mulf %126, %124 : vector<8x128xf32>
    %128 = arith.mulf %119, %100 : vector<8x128xf32>
    %129 = arith.addf %127, %128 : vector<8x128xf32>
    %c2_i32 = arith.constant 2 : i32
    %130 = vector.broadcast %c2_i32 : i32 to vector<8x128xi32>
    %131 = arith.cmpi sgt, %35, %130 : vector<8x128xi32>
    %132 = arith.select %131, %129, %100 : vector<8x128xi1>, vector<8x128xf32>
    %c24 = arith.constant 24 : index
    %c0_35 = arith.constant 0 : index
    %133 = vector.load %arg9[%c24, %c0_35] : memref<64x384xf32, #tpu.memory_space<vmem>>, vector<8x384xf32>
    %cst_36 = arith.constant dense<0.000000e+00> : vector<8x384xf32>
    %134 = tpu.matmul %132, %31, %cst_36 {dimension_numbers = #tpu.dot_dimension_numbers<[1], [0], [0], [1], [0, 0, 1, 1], [], []>} : vector<8x128xf32>, vector<128x384xf32>, vector<8x384xf32> -> vector<8x384xf32>
    %135 = arith.addf %134, %34 : vector<8x384xf32>
    %136 = vector.extract_strided_slice %133 {offsets = [0, 0], sizes = [8, 128], strides = [1, 1]} : vector<8x384xf32> to vector<8x128xf32>
    %137 = vector.extract_strided_slice %135 {offsets = [0, 0], sizes = [8, 128], strides = [1, 1]} : vector<8x384xf32> to vector<8x128xf32>
    %138 = arith.addf %136, %137 : vector<8x128xf32>
    %139 = arith.negf %138 : vector<8x128xf32>
    %140 = math.exp %139 : vector<8x128xf32>
    %cst_37 = arith.constant 1.000000e+00 : f32
    %141 = vector.broadcast %cst_37 : f32 to vector<8x128xf32>
    %142 = arith.addf %141, %140 : vector<8x128xf32>
    %143 = arith.divf %141, %142 : vector<8x128xf32>
    %144 = vector.extract_strided_slice %133 {offsets = [0, 128], sizes = [8, 128], strides = [1, 1]} : vector<8x384xf32> to vector<8x128xf32>
    %145 = vector.extract_strided_slice %135 {offsets = [0, 128], sizes = [8, 128], strides = [1, 1]} : vector<8x384xf32> to vector<8x128xf32>
    %146 = arith.addf %144, %145 : vector<8x128xf32>
    %147 = arith.negf %146 : vector<8x128xf32>
    %148 = math.exp %147 : vector<8x128xf32>
    %cst_38 = arith.constant 1.000000e+00 : f32
    %149 = vector.broadcast %cst_38 : f32 to vector<8x128xf32>
    %150 = arith.addf %149, %148 : vector<8x128xf32>
    %151 = arith.divf %149, %150 : vector<8x128xf32>
    %152 = vector.extract_strided_slice %133 {offsets = [0, 256], sizes = [8, 128], strides = [1, 1]} : vector<8x384xf32> to vector<8x128xf32>
    %153 = vector.extract_strided_slice %135 {offsets = [0, 256], sizes = [8, 128], strides = [1, 1]} : vector<8x384xf32> to vector<8x128xf32>
    %154 = arith.mulf %143, %153 : vector<8x128xf32>
    %155 = arith.addf %152, %154 : vector<8x128xf32>
    %156 = math.tanh %155 : vector<8x128xf32>
    %cst_39 = arith.constant 1.000000e+00 : f32
    %157 = vector.broadcast %cst_39 : f32 to vector<8x128xf32>
    %158 = arith.subf %157, %151 : vector<8x128xf32>
    %159 = arith.mulf %158, %156 : vector<8x128xf32>
    %160 = arith.mulf %151, %132 : vector<8x128xf32>
    %161 = arith.addf %159, %160 : vector<8x128xf32>
    %c3_i32 = arith.constant 3 : i32
    %162 = vector.broadcast %c3_i32 : i32 to vector<8x128xi32>
    %163 = arith.cmpi sgt, %35, %162 : vector<8x128xi32>
    %164 = arith.select %163, %161, %132 : vector<8x128xi1>, vector<8x128xf32>
    %c32 = arith.constant 32 : index
    %c0_40 = arith.constant 0 : index
    %165 = vector.load %arg9[%c32, %c0_40] : memref<64x384xf32, #tpu.memory_space<vmem>>, vector<8x384xf32>
    %cst_41 = arith.constant dense<0.000000e+00> : vector<8x384xf32>
    %166 = tpu.matmul %164, %31, %cst_41 {dimension_numbers = #tpu.dot_dimension_numbers<[1], [0], [0], [1], [0, 0, 1, 1], [], []>} : vector<8x128xf32>, vector<128x384xf32>, vector<8x384xf32> -> vector<8x384xf32>
    %167 = arith.addf %166, %34 : vector<8x384xf32>
    %168 = vector.extract_strided_slice %165 {offsets = [0, 0], sizes = [8, 128], strides = [1, 1]} : vector<8x384xf32> to vector<8x128xf32>
    %169 = vector.extract_strided_slice %167 {offsets = [0, 0], sizes = [8, 128], strides = [1, 1]} : vector<8x384xf32> to vector<8x128xf32>
    %170 = arith.addf %168, %169 : vector<8x128xf32>
    %171 = arith.negf %170 : vector<8x128xf32>
    %172 = math.exp %171 : vector<8x128xf32>
    %cst_42 = arith.constant 1.000000e+00 : f32
    %173 = vector.broadcast %cst_42 : f32 to vector<8x128xf32>
    %174 = arith.addf %173, %172 : vector<8x128xf32>
    %175 = arith.divf %173, %174 : vector<8x128xf32>
    %176 = vector.extract_strided_slice %165 {offsets = [0, 128], sizes = [8, 128], strides = [1, 1]} : vector<8x384xf32> to vector<8x128xf32>
    %177 = vector.extract_strided_slice %167 {offsets = [0, 128], sizes = [8, 128], strides = [1, 1]} : vector<8x384xf32> to vector<8x128xf32>
    %178 = arith.addf %176, %177 : vector<8x128xf32>
    %179 = arith.negf %178 : vector<8x128xf32>
    %180 = math.exp %179 : vector<8x128xf32>
    %cst_43 = arith.constant 1.000000e+00 : f32
    %181 = vector.broadcast %cst_43 : f32 to vector<8x128xf32>
    %182 = arith.addf %181, %180 : vector<8x128xf32>
    %183 = arith.divf %181, %182 : vector<8x128xf32>
    %184 = vector.extract_strided_slice %165 {offsets = [0, 256], sizes = [8, 128], strides = [1, 1]} : vector<8x384xf32> to vector<8x128xf32>
    %185 = vector.extract_strided_slice %167 {offsets = [0, 256], sizes = [8, 128], strides = [1, 1]} : vector<8x384xf32> to vector<8x128xf32>
    %186 = arith.mulf %175, %185 : vector<8x128xf32>
    %187 = arith.addf %184, %186 : vector<8x128xf32>
    %188 = math.tanh %187 : vector<8x128xf32>
    %cst_44 = arith.constant 1.000000e+00 : f32
    %189 = vector.broadcast %cst_44 : f32 to vector<8x128xf32>
    %190 = arith.subf %189, %183 : vector<8x128xf32>
    %191 = arith.mulf %190, %188 : vector<8x128xf32>
    %192 = arith.mulf %183, %164 : vector<8x128xf32>
    %193 = arith.addf %191, %192 : vector<8x128xf32>
    %c4_i32 = arith.constant 4 : i32
    %194 = vector.broadcast %c4_i32 : i32 to vector<8x128xi32>
    %195 = arith.cmpi sgt, %35, %194 : vector<8x128xi32>
    %196 = arith.select %195, %193, %164 : vector<8x128xi1>, vector<8x128xf32>
    %c40 = arith.constant 40 : index
    %c0_45 = arith.constant 0 : index
    %197 = vector.load %arg9[%c40, %c0_45] : memref<64x384xf32, #tpu.memory_space<vmem>>, vector<8x384xf32>
    %cst_46 = arith.constant dense<0.000000e+00> : vector<8x384xf32>
    %198 = tpu.matmul %196, %31, %cst_46 {dimension_numbers = #tpu.dot_dimension_numbers<[1], [0], [0], [1], [0, 0, 1, 1], [], []>} : vector<8x128xf32>, vector<128x384xf32>, vector<8x384xf32> -> vector<8x384xf32>
    %199 = arith.addf %198, %34 : vector<8x384xf32>
    %200 = vector.extract_strided_slice %197 {offsets = [0, 0], sizes = [8, 128], strides = [1, 1]} : vector<8x384xf32> to vector<8x128xf32>
    %201 = vector.extract_strided_slice %199 {offsets = [0, 0], sizes = [8, 128], strides = [1, 1]} : vector<8x384xf32> to vector<8x128xf32>
    %202 = arith.addf %200, %201 : vector<8x128xf32>
    %203 = arith.negf %202 : vector<8x128xf32>
    %204 = math.exp %203 : vector<8x128xf32>
    %cst_47 = arith.constant 1.000000e+00 : f32
    %205 = vector.broadcast %cst_47 : f32 to vector<8x128xf32>
    %206 = arith.addf %205, %204 : vector<8x128xf32>
    %207 = arith.divf %205, %206 : vector<8x128xf32>
    %208 = vector.extract_strided_slice %197 {offsets = [0, 128], sizes = [8, 128], strides = [1, 1]} : vector<8x384xf32> to vector<8x128xf32>
    %209 = vector.extract_strided_slice %199 {offsets = [0, 128], sizes = [8, 128], strides = [1, 1]} : vector<8x384xf32> to vector<8x128xf32>
    %210 = arith.addf %208, %209 : vector<8x128xf32>
    %211 = arith.negf %210 : vector<8x128xf32>
    %212 = math.exp %211 : vector<8x128xf32>
    %cst_48 = arith.constant 1.000000e+00 : f32
    %213 = vector.broadcast %cst_48 : f32 to vector<8x128xf32>
    %214 = arith.addf %213, %212 : vector<8x128xf32>
    %215 = arith.divf %213, %214 : vector<8x128xf32>
    %216 = vector.extract_strided_slice %197 {offsets = [0, 256], sizes = [8, 128], strides = [1, 1]} : vector<8x384xf32> to vector<8x128xf32>
    %217 = vector.extract_strided_slice %199 {offsets = [0, 256], sizes = [8, 128], strides = [1, 1]} : vector<8x384xf32> to vector<8x128xf32>
    %218 = arith.mulf %207, %217 : vector<8x128xf32>
    %219 = arith.addf %216, %218 : vector<8x128xf32>
    %220 = math.tanh %219 : vector<8x128xf32>
    %cst_49 = arith.constant 1.000000e+00 : f32
    %221 = vector.broadcast %cst_49 : f32 to vector<8x128xf32>
    %222 = arith.subf %221, %215 : vector<8x128xf32>
    %223 = arith.mulf %222, %220 : vector<8x128xf32>
    %224 = arith.mulf %215, %196 : vector<8x128xf32>
    %225 = arith.addf %223, %224 : vector<8x128xf32>
    %c5_i32 = arith.constant 5 : i32
    %226 = vector.broadcast %c5_i32 : i32 to vector<8x128xi32>
    %227 = arith.cmpi sgt, %35, %226 : vector<8x128xi32>
    %228 = arith.select %227, %225, %196 : vector<8x128xi1>, vector<8x128xf32>
    %c48 = arith.constant 48 : index
    %c0_50 = arith.constant 0 : index
    %229 = vector.load %arg9[%c48, %c0_50] : memref<64x384xf32, #tpu.memory_space<vmem>>, vector<8x384xf32>
    %cst_51 = arith.constant dense<0.000000e+00> : vector<8x384xf32>
    %230 = tpu.matmul %228, %31, %cst_51 {dimension_numbers = #tpu.dot_dimension_numbers<[1], [0], [0], [1], [0, 0, 1, 1], [], []>} : vector<8x128xf32>, vector<128x384xf32>, vector<8x384xf32> -> vector<8x384xf32>
    %231 = arith.addf %230, %34 : vector<8x384xf32>
    %232 = vector.extract_strided_slice %229 {offsets = [0, 0], sizes = [8, 128], strides = [1, 1]} : vector<8x384xf32> to vector<8x128xf32>
    %233 = vector.extract_strided_slice %231 {offsets = [0, 0], sizes = [8, 128], strides = [1, 1]} : vector<8x384xf32> to vector<8x128xf32>
    %234 = arith.addf %232, %233 : vector<8x128xf32>
    %235 = arith.negf %234 : vector<8x128xf32>
    %236 = math.exp %235 : vector<8x128xf32>
    %cst_52 = arith.constant 1.000000e+00 : f32
    %237 = vector.broadcast %cst_52 : f32 to vector<8x128xf32>
    %238 = arith.addf %237, %236 : vector<8x128xf32>
    %239 = arith.divf %237, %238 : vector<8x128xf32>
    %240 = vector.extract_strided_slice %229 {offsets = [0, 128], sizes = [8, 128], strides = [1, 1]} : vector<8x384xf32> to vector<8x128xf32>
    %241 = vector.extract_strided_slice %231 {offsets = [0, 128], sizes = [8, 128], strides = [1, 1]} : vector<8x384xf32> to vector<8x128xf32>
    %242 = arith.addf %240, %241 : vector<8x128xf32>
    %243 = arith.negf %242 : vector<8x128xf32>
    %244 = math.exp %243 : vector<8x128xf32>
    %cst_53 = arith.constant 1.000000e+00 : f32
    %245 = vector.broadcast %cst_53 : f32 to vector<8x128xf32>
    %246 = arith.addf %245, %244 : vector<8x128xf32>
    %247 = arith.divf %245, %246 : vector<8x128xf32>
    %248 = vector.extract_strided_slice %229 {offsets = [0, 256], sizes = [8, 128], strides = [1, 1]} : vector<8x384xf32> to vector<8x128xf32>
    %249 = vector.extract_strided_slice %231 {offsets = [0, 256], sizes = [8, 128], strides = [1, 1]} : vector<8x384xf32> to vector<8x128xf32>
    %250 = arith.mulf %239, %249 : vector<8x128xf32>
    %251 = arith.addf %248, %250 : vector<8x128xf32>
    %252 = math.tanh %251 : vector<8x128xf32>
    %cst_54 = arith.constant 1.000000e+00 : f32
    %253 = vector.broadcast %cst_54 : f32 to vector<8x128xf32>
    %254 = arith.subf %253, %247 : vector<8x128xf32>
    %255 = arith.mulf %254, %252 : vector<8x128xf32>
    %256 = arith.mulf %247, %228 : vector<8x128xf32>
    %257 = arith.addf %255, %256 : vector<8x128xf32>
    %c6_i32 = arith.constant 6 : i32
    %258 = vector.broadcast %c6_i32 : i32 to vector<8x128xi32>
    %259 = arith.cmpi sgt, %35, %258 : vector<8x128xi32>
    %260 = arith.select %259, %257, %228 : vector<8x128xi1>, vector<8x128xf32>
    %c56 = arith.constant 56 : index
    %c0_55 = arith.constant 0 : index
    %261 = vector.load %arg9[%c56, %c0_55] : memref<64x384xf32, #tpu.memory_space<vmem>>, vector<8x384xf32>
    %cst_56 = arith.constant dense<0.000000e+00> : vector<8x384xf32>
    %262 = tpu.matmul %260, %31, %cst_56 {dimension_numbers = #tpu.dot_dimension_numbers<[1], [0], [0], [1], [0, 0, 1, 1], [], []>} : vector<8x128xf32>, vector<128x384xf32>, vector<8x384xf32> -> vector<8x384xf32>
    %263 = arith.addf %262, %34 : vector<8x384xf32>
    %264 = vector.extract_strided_slice %261 {offsets = [0, 0], sizes = [8, 128], strides = [1, 1]} : vector<8x384xf32> to vector<8x128xf32>
    %265 = vector.extract_strided_slice %263 {offsets = [0, 0], sizes = [8, 128], strides = [1, 1]} : vector<8x384xf32> to vector<8x128xf32>
    %266 = arith.addf %264, %265 : vector<8x128xf32>
    %267 = arith.negf %266 : vector<8x128xf32>
    %268 = math.exp %267 : vector<8x128xf32>
    %cst_57 = arith.constant 1.000000e+00 : f32
    %269 = vector.broadcast %cst_57 : f32 to vector<8x128xf32>
    %270 = arith.addf %269, %268 : vector<8x128xf32>
    %271 = arith.divf %269, %270 : vector<8x128xf32>
    %272 = vector.extract_strided_slice %261 {offsets = [0, 128], sizes = [8, 128], strides = [1, 1]} : vector<8x384xf32> to vector<8x128xf32>
    %273 = vector.extract_strided_slice %263 {offsets = [0, 128], sizes = [8, 128], strides = [1, 1]} : vector<8x384xf32> to vector<8x128xf32>
    %274 = arith.addf %272, %273 : vector<8x128xf32>
    %275 = arith.negf %274 : vector<8x128xf32>
    %276 = math.exp %275 : vector<8x128xf32>
    %cst_58 = arith.constant 1.000000e+00 : f32
    %277 = vector.broadcast %cst_58 : f32 to vector<8x128xf32>
    %278 = arith.addf %277, %276 : vector<8x128xf32>
    %279 = arith.divf %277, %278 : vector<8x128xf32>
    %280 = vector.extract_strided_slice %261 {offsets = [0, 256], sizes = [8, 128], strides = [1, 1]} : vector<8x384xf32> to vector<8x128xf32>
    %281 = vector.extract_strided_slice %263 {offsets = [0, 256], sizes = [8, 128], strides = [1, 1]} : vector<8x384xf32> to vector<8x128xf32>
    %282 = arith.mulf %271, %281 : vector<8x128xf32>
    %283 = arith.addf %280, %282 : vector<8x128xf32>
    %284 = math.tanh %283 : vector<8x128xf32>
    %cst_59 = arith.constant 1.000000e+00 : f32
    %285 = vector.broadcast %cst_59 : f32 to vector<8x128xf32>
    %286 = arith.subf %285, %279 : vector<8x128xf32>
    %287 = arith.mulf %286, %284 : vector<8x128xf32>
    %288 = arith.mulf %279, %260 : vector<8x128xf32>
    %289 = arith.addf %287, %288 : vector<8x128xf32>
    %c7_i32 = arith.constant 7 : i32
    %290 = vector.broadcast %c7_i32 : i32 to vector<8x128xi32>
    %291 = arith.cmpi sgt, %35, %290 : vector<8x128xi32>
    %292 = arith.select %291, %289, %260 : vector<8x128xi1>, vector<8x128xf32>
    %c0_60 = arith.constant 0 : index
    %c0_61 = arith.constant 0 : index
    %293 = vector.load %arg6[%c0_60, %c0_61] : memref<128x64xf32, #tpu.memory_space<vmem>>, vector<128x64xf32>
    %cst_62 = arith.constant dense<0.000000e+00> : vector<8x64xf32>
    %294 = tpu.matmul %292, %293, %cst_62 {dimension_numbers = #tpu.dot_dimension_numbers<[1], [0], [0], [1], [0, 0, 1, 1], [], []>} : vector<8x128xf32>, vector<128x64xf32>, vector<8x64xf32> -> vector<8x64xf32>
    %295 = vector.extract_strided_slice %294 {offsets = [0, 0], sizes = [8, 32], strides = [1, 1]} : vector<8x64xf32> to vector<8x32xf32>
    %296 = vector.extract_strided_slice %294 {offsets = [0, 32], sizes = [8, 32], strides = [1, 1]} : vector<8x64xf32> to vector<8x32xf32>
    %c0_63 = arith.constant 0 : index
    %c0_64 = arith.constant 0 : index
    %297 = vector.load %arg2[%c0_63, %c0_64] : memref<8x8xf32, #tpu.memory_space<vmem>>, vector<8x8xf32>
    %cst_65 = arith.constant dense<0.000000e+00> : vector<8x32xf32>
    %298 = tpu.matmul %297, %295, %cst_65 {dimension_numbers = #tpu.dot_dimension_numbers<[1], [0], [0], [1], [0, 0, 1, 1], [], []>} : vector<8x8xf32>, vector<8x32xf32>, vector<8x32xf32> -> vector<8x32xf32>
    %c0_66 = arith.constant 0 : index
    %c0_67 = arith.constant 0 : index
    %299 = vector.load %arg7[%c0_66, %c0_67] : memref<3x32xf32, #tpu.memory_space<vmem>>, vector<1x32xf32>
    %c1_68 = arith.constant 1 : index
    %c0_69 = arith.constant 0 : index
    %300 = vector.load %arg7[%c1_68, %c0_69] : memref<3x32xf32, #tpu.memory_space<vmem>>, vector<1x32xf32>
    %c2_70 = arith.constant 2 : index
    %c0_71 = arith.constant 0 : index
    %301 = vector.load %arg7[%c2_70, %c0_71] : memref<3x32xf32, #tpu.memory_space<vmem>>, vector<1x1xf32>
    %302 = arith.addf %298, %296 : vector<8x32xf32>
    %303 = vector.broadcast %299 : vector<1x32xf32> to vector<8x32xf32>
    %304 = arith.addf %302, %303 : vector<8x32xf32>
    %cst_72 = arith.constant 0.000000e+00 : f32
    %305 = vector.broadcast %cst_72 : f32 to vector<8x32xf32>
    %306 = arith.maximumf %304, %305 : vector<8x32xf32>
    %307 = vector.broadcast %300 : vector<1x32xf32> to vector<8x32xf32>
    %308 = arith.mulf %306, %307 : vector<8x32xf32>
    %cst_73 = arith.constant dense<0.000000e+00> : vector<8xf32>
    %309 = vector.multi_reduction <add>, %308, %cst_73 [1] : vector<8x32xf32> to vector<8xf32>
    %310 = vector.shape_cast %309 : vector<8xf32> to vector<8x1xf32>
    %311 = vector.broadcast %301 : vector<1x1xf32> to vector<8x1xf32>
    %312 = arith.addf %310, %311 : vector<8x1xf32>
    %c0_74 = arith.constant 0 : index
    %c0_75 = arith.constant 0 : index
    %313 = vector.load %arg8[%c0_74, %c0_75] : memref<8x1xf32, #tpu.memory_space<vmem>>, vector<8x1xf32>
    tpu.vector_store %arg8[%c0_74, %c0_75], %312 {strides = array<i32>} : memref<8x1xf32, #tpu.memory_space<vmem>>, vector<8x1xf32>,
    return
  }
}

</mosaic_0001>

<llo_original>
// kernel: tpu_custom_call.1
$region0: #{tpu_custom_call.1}
  #allocation0 [shape = 'u32[]', space=smem, size = 0x4, offset = 0x4, fixed_abs, tag = 'smem constant byte address 0x4 - core index']
  #allocation1 [shape = 'u32[72,128]{1,0:T(1,128)}', space=vmem, size = 0x9000, scoped, tag = 'internal scratch']
  #allocation2 [shape = 'f32[64,384]{1,0:T(8,128)}', space=vmem, size = 0x18000, scoped, tag = 'scratch operand']
  %s0 = inlined_call_operand.vmem [shape: s32[4,64,1], index: 0, kind: input, shape index: {}]
  %s1 = inlined_call_operand.vmem [shape: s32[8,128], index: 1, kind: input, shape index: {}]
  %s2 = inlined_call_operand.vmem [shape: f32[8,8], index: 2, kind: input, shape index: {}]
  %s3 = inlined_call_operand.hbm [shape: f32[256,384], index: 3, kind: input, shape index: {}]
  %s4 = inlined_call_operand.vmem [shape: f32[128,384], index: 4, kind: input, shape index: {}]
  %s5 = inlined_call_operand.vmem [shape: f32[1,384], index: 5, kind: input, shape index: {}]
  %s6 = inlined_call_operand.vmem [shape: f32[128,64], index: 6, kind: input, shape index: {}]
  %s7 = inlined_call_operand.vmem [shape: f32[3,32], index: 7, kind: input, shape index: {}]
  %s8 = inlined_call_operand.vmem [shape: f32[8,1], index: 8, kind: output, shape index: {}]
  %s9 = sld [smem:[#allocation0]]
  $region46: #{tpu_custom_call.1} parent=0
    _
  %s11 = ssub.s32 1, %s9
  %s12 = scalar_select 0, %s11, %s9
  $region1: #{tpu_custom_call.1} parent=0
    #allocation3 [shape = 'u8[393216]{0}', space=vmem, size = 0x60000, scoped, tag = 'input window, operand 3, single buffered']
    #allocation4 [shape = 's32[1]{0}', space=sflag, size = 0x4, scoped, tag = 'scoped memory for tpu_custom_call.1']
    %13 = vsyncpa [#allocation4], 0
    // Predicated region
    $region2: #{tpu_custom_call.1} parent=1 // pred_check
      _
    $region3: #{tpu_custom_call.1} parent=1 // pred_check_branch
      %15 = sbr.rel (0) target = $region5
    $region4: #{tpu_custom_call.1} parent=1 // pred_region
      _
    $region5: #{tpu_custom_call.1} parent=1 // pred_fallthru
      _
    // Predicated region
    $region6: #{tpu_custom_call.1} parent=1 // pred_check
      _
    $region7: #{tpu_custom_call.1} parent=1 // pred_check_branch
      %17 = sbr.rel (0) target = $region9
    $region8: #{tpu_custom_call.1} parent=1 // pred_region
      _
    $region9: #{tpu_custom_call.1} parent=1 // pred_fallthru
      _
    // Predicated region
    $region10: #{tpu_custom_call.1} parent=1 // pred_check
      _
    $region11: #{tpu_custom_call.1} parent=1 // pred_check_branch
      %19 = sbr.rel (0) target = $region13
    $region12: #{tpu_custom_call.1} parent=1 // pred_region
      _
    $region13: #{tpu_custom_call.1} parent=1 // pred_fallthru
      _
    // Predicated region
    $region14: #{tpu_custom_call.1} parent=1 // pred_check
      _
    $region15: #{tpu_custom_call.1} parent=1 // pred_check_branch
      %21 = sbr.rel (0) target = $region17
    $region16: #{tpu_custom_call.1} parent=1 // pred_region
      %23 = vsyncadd [#allocation4], 0
      %s24 = sshll.u32 %s3, 4
      %s25 = int_to_ptr.hbm [resolvable:$true] %s24
      %s26 = sshll.u32 [#allocation3], 4
      %s27 = int_to_ptr.vmem [resolvable:$true] %s26
      %32 = dma.hbm_to_vmem [thread:$0]  %s25, 12288, %s27, [#allocation4], 384, 384, 24
    $region17: #{tpu_custom_call.1} parent=1 // pred_fallthru
      _
    // Predicated region
    $region18: #{tpu_custom_call.1} parent=1 // pred_check
      _
    $region19: #{tpu_custom_call.1} parent=1 // pred_check_branch
      %34 = sbr.rel (0) target = $region21
    $region20: #{tpu_custom_call.1} parent=1 // pred_region
      _
    $region21: #{tpu_custom_call.1} parent=1 // pred_fallthru
      _
    // Predicated region
    $region22: #{tpu_custom_call.1} parent=1 // pred_check
      _
    $region23: #{tpu_custom_call.1} parent=1 // pred_check_branch
      %36 = sbr.rel (0) target = $region25
    $region24: #{tpu_custom_call.1} parent=1 // pred_region
      _
    $region25: #{tpu_custom_call.1} parent=1 // pred_fallthru
      _
    // Predicated region
    $region26: #{tpu_custom_call.1} parent=1 // pred_check
      _
    $region27: #{tpu_custom_call.1} parent=1 // pred_check_branch
      %38 = sbr.rel (0) target = $region29
    $region28: #{tpu_custom_call.1} parent=1 // pred_region
      _
    $region29: #{tpu_custom_call.1} parent=1 // pred_fallthru
      _
    // Predicated region
    $region30: #{tpu_custom_call.1} parent=1 // pred_check
      _
    $region31: #{tpu_custom_call.1} parent=1 // pred_check_branch
      %40 = sbr.rel (0) target = $region33
    $region32: #{tpu_custom_call.1} parent=1 // pred_region
      _
    $region33: #{tpu_custom_call.1} parent=1 // pred_fallthru
      _
    // Predicated region
    $region34: #{tpu_custom_call.1} parent=1 // pred_check
      _
    $region35: #{tpu_custom_call.1} parent=1 // pred_check_branch
      %42 = sbr.rel (0) target = $region37
    $region36: #{tpu_custom_call.1} parent=1 // pred_region
      %44 = dma.done [#allocation4], 12288
    $region37: #{tpu_custom_call.1} parent=1 // pred_fallthru
      _
    %v45 = vlaneseq
    %v46 = vand.u32 %v45, 127
    %v47 = vadd.s32 %v46, 128
    %v48 = vld [vmem:[%s0] sm:$0xff]
    %v49 = vld [vmem:[%s0 + $0x8] sm:$0xff]
    %v50 = vld [vmem:[%s0 + $0x10] sm:$0xff]
    %v51 = vld [vmem:[%s0 + $0x18] sm:$0xff]
    %v52 = vld [vmem:[%s0 + $0x20] sm:$0xff]
    %v53 = vld [vmem:[%s0 + $0x28] sm:$0xff]
    %v54 = vld [vmem:[%s0 + $0x30] sm:$0xff]
    %v55 = vld [vmem:[%s0 + $0x38] sm:$0xff]
    %56 = vset.pattern.permute.xlu0 0
    %57 = vperm.xlu0 %56, %v48
    %v58 = vpop.permute.xlu0 %57
    %59 = vset.pattern.permute.xlu0 0
    %60 = vperm.xlu0 %59, %v49
    %v61 = vpop.permute.xlu0 %60
    %62 = vset.pattern.permute.xlu0 0
    %63 = vperm.xlu0 %62, %v50
    %v64 = vpop.permute.xlu0 %63
    %65 = vset.pattern.permute.xlu0 0
    %66 = vperm.xlu0 %65, %v51
    %v67 = vpop.permute.xlu0 %66
    %68 = vset.pattern.permute.xlu0 0
    %69 = vperm.xlu0 %68, %v52
    %v70 = vpop.permute.xlu0 %69
    %71 = vset.pattern.permute.xlu0 0
    %72 = vperm.xlu0 %71, %v53
    %v73 = vpop.permute.xlu0 %72
    %74 = vset.pattern.permute.xlu0 0
    %75 = vperm.xlu0 %74, %v54
    %v76 = vpop.permute.xlu0 %75
    %77 = vset.pattern.permute.xlu0 0
    %78 = vperm.xlu0 %77, %v55
    %v79 = vpop.permute.xlu0 %78
    %vm80 = vcmp.eq.s32.totalorder %v58, %v46
    %vm81 = vcmp.eq.s32.totalorder %v58, %v47
    %vm82 = vcmp.eq.s32.totalorder %v61, %v46
    %vm83 = vcmp.eq.s32.totalorder %v61, %v47
    %vm84 = vcmp.eq.s32.totalorder %v64, %v46
    %vm85 = vcmp.eq.s32.totalorder %v64, %v47
    %vm86 = vcmp.eq.s32.totalorder %v67, %v46
    %vm87 = vcmp.eq.s32.totalorder %v67, %v47
    %vm88 = vcmp.eq.s32.totalorder %v70, %v46
    %vm89 = vcmp.eq.s32.totalorder %v70, %v47
    %vm90 = vcmp.eq.s32.totalorder %v73, %v46
    %vm91 = vcmp.eq.s32.totalorder %v73, %v47
    %vm92 = vcmp.eq.s32.totalorder %v76, %v46
    %vm93 = vcmp.eq.s32.totalorder %v76, %v47
    %vm94 = vcmp.eq.s32.totalorder %v79, %v46
    %vm95 = vcmp.eq.s32.totalorder %v79, %v47
    %v96 = vsel %vm80, 1, 0
    %v97 = vsel %vm81, 1, 0
    %v98 = vsel %vm82, 1, 0
    %v99 = vsel %vm83, 1, 0
    %v100 = vsel %vm84, 1, 0
    %v101 = vsel %vm85, 1, 0
    %v102 = vsel %vm86, 1, 0
    %v103 = vsel %vm87, 1, 0
    %v104 = vsel %vm88, 1, 0
    %v105 = vsel %vm89, 1, 0
    %v106 = vsel %vm90, 1, 0
    %v107 = vsel %vm91, 1, 0
    %v108 = vsel %vm92, 1, 0
    %v109 = vsel %vm93, 1, 0
    %v110 = vsel %vm94, 1, 0
    %v111 = vsel %vm95, 1, 0
    %v112 = vcvt.s32.f32 %v96
    %v113 = vcvt.s32.f32 %v97
    %v114 = vcvt.s32.f32 %v98
    %v115 = vcvt.s32.f32 %v99
    %v116 = vcvt.s32.f32 %v100
    %v117 = vcvt.s32.f32 %v101
    %v118 = vcvt.s32.f32 %v102
    %v119 = vcvt.s32.f32 %v103
    %v120 = vcvt.s32.f32 %v104
    %v121 = vcvt.s32.f32 %v105
    %v122 = vcvt.s32.f32 %v106
    %v123 = vcvt.s32.f32 %v107
    %v124 = vcvt.s32.f32 %v108
    %v125 = vcvt.s32.f32 %v109
    %v126 = vcvt.s32.f32 %v110
    %v127 = vcvt.s32.f32 %v111
    %s128 = scalar_lea.vmem %s0, 64
    %v129 = vld [vmem:[%s128] sm:$0xff]
    %v130 = vld [vmem:[%s128 + $0x8] sm:$0xff]
    %v131 = vld [vmem:[%s128 + $0x10] sm:$0xff]
    %v132 = vld [vmem:[%s128 + $0x18] sm:$0xff]
    %v133 = vld [vmem:[%s128 + $0x20] sm:$0xff]
    %v134 = vld [vmem:[%s128 + $0x28] sm:$0xff]
    %v135 = vld [vmem:[%s128 + $0x30] sm:$0xff]
    %v136 = vld [vmem:[%s128 + $0x38] sm:$0xff]
    %137 = vset.pattern.permute.xlu0 0
    %138 = vperm.xlu0 %137, %v129
    %v139 = vpop.permute.xlu0 %138
    %140 = vset.pattern.permute.xlu0 0
    %141 = vperm.xlu0 %140, %v130
    %v142 = vpop.permute.xlu0 %141
    %143 = vset.pattern.permute.xlu0 0
    %144 = vperm.xlu0 %143, %v131
    %v145 = vpop.permute.xlu0 %144
    %146 = vset.pattern.permute.xlu0 0
    %147 = vperm.xlu0 %146, %v132
    %v148 = vpop.permute.xlu0 %147
    %149 = vset.pattern.permute.xlu0 0
    %150 = vperm.xlu0 %149, %v133
    %v151 = vpop.permute.xlu0 %150
    %152 = vset.pattern.permute.xlu0 0
    %153 = vperm.xlu0 %152, %v134
    %v154 = vpop.permute.xlu0 %153
    %155 = vset.pattern.permute.xlu0 0
    %156 = vperm.xlu0 %155, %v135
    %v157 = vpop.permute.xlu0 %156
    %158 = vset.pattern.permute.xlu0 0
    %159 = vperm.xlu0 %158, %v136
    %v160 = vpop.permute.xlu0 %159
    %vm161 = vcmp.eq.s32.totalorder %v139, %v46
    %vm162 = vcmp.eq.s32.totalorder %v139, %v47
    %vm163 = vcmp.eq.s32.totalorder %v142, %v46
    %vm164 = vcmp.eq.s32.totalorder %v142, %v47
    %vm165 = vcmp.eq.s32.totalorder %v145, %v46
    %vm166 = vcmp.eq.s32.totalorder %v145, %v47
    %vm167 = vcmp.eq.s32.totalorder %v148, %v46
    %vm168 = vcmp.eq.s32.totalorder %v148, %v47
    %vm169 = vcmp.eq.s32.totalorder %v151, %v46
    %vm170 = vcmp.eq.s32.totalorder %v151, %v47
    %vm171 = vcmp.eq.s32.totalorder %v154, %v46
    %vm172 = vcmp.eq.s32.totalorder %v154, %v47
    %vm173 = vcmp.eq.s32.totalorder %v157, %v46
    %vm174 = vcmp.eq.s32.totalorder %v157, %v47
    %vm175 = vcmp.eq.s32.totalorder %v160, %v46
    %vm176 = vcmp.eq.s32.totalorder %v160, %v47
    %v177 = vsel %vm161, 1, 0
    %v178 = vsel %vm162, 1, 0
    %v179 = vsel %vm163, 1, 0
    %v180 = vsel %vm164, 1, 0
    %v181 = vsel %vm165, 1, 0
    %v182 = vsel %vm166, 1, 0
    %v183 = vsel %vm167, 1, 0
    %v184 = vsel %vm168, 1, 0
    %v185 = vsel %vm169, 1, 0
    %v186 = vsel %vm170, 1, 0
    %v187 = vsel %vm171, 1, 0
    %v188 = vsel %vm172, 1, 0
    %v189 = vsel %vm173, 1, 0
    %v190 = vsel %vm174, 1, 0
    %v191 = vsel %vm175, 1, 0
    %v192 = vsel %vm176, 1, 0
    %v193 = vcvt.s32.f32 %v177
    %v194 = vcvt.s32.f32 %v178
    %v195 = vcvt.s32.f32 %v179
    %v196 = vcvt.s32.f32 %v180
    %v197 = vcvt.s32.f32 %v181
    %v198 = vcvt.s32.f32 %v182
    %v199 = vcvt.s32.f32 %v183
    %v200 = vcvt.s32.f32 %v184
    %v201 = vcvt.s32.f32 %v185
    %v202 = vcvt.s32.f32 %v186
    %v203 = vcvt.s32.f32 %v187
    %v204 = vcvt.s32.f32 %v188
    %v205 = vcvt.s32.f32 %v189
    %v206 = vcvt.s32.f32 %v190
    %v207 = vcvt.s32.f32 %v191
    %v208 = vcvt.s32.f32 %v192
    %v209 = vadd.f32 %v112, %v193
    %v210 = vadd.f32 %v113, %v194
    %v211 = vadd.f32 %v114, %v195
    %v212 = vadd.f32 %v115, %v196
    %v213 = vadd.f32 %v116, %v197
    %v214 = vadd.f32 %v117, %v198
    %v215 = vadd.f32 %v118, %v199
    %v216 = vadd.f32 %v119, %v200
    %v217 = vadd.f32 %v120, %v201
    %v218 = vadd.f32 %v121, %v202
    %v219 = vadd.f32 %v122, %v203
    %v220 = vadd.f32 %v123, %v204
    %v221 = vadd.f32 %v124, %v205
    %v222 = vadd.f32 %v125, %v206
    %v223 = vadd.f32 %v126, %v207
    %v224 = vadd.f32 %v127, %v208
    %s225 = scalar_lea.vmem %s0, 128
    %v226 = vld [vmem:[%s225] sm:$0xff]
    %v227 = vld [vmem:[%s225 + $0x8] sm:$0xff]
    %v228 = vld [vmem:[%s225 + $0x10] sm:$0xff]
    %v229 = vld [vmem:[%s225 + $0x18] sm:$0xff]
    %v230 = vld [vmem:[%s225 + $0x20] sm:$0xff]
    %v231 = vld [vmem:[%s225 + $0x28] sm:$0xff]
    %v232 = vld [vmem:[%s225 + $0x30] sm:$0xff]
    %v233 = vld [vmem:[%s225 + $0x38] sm:$0xff]
    %234 = vset.pattern.permute.xlu0 0
    %235 = vperm.xlu0 %234, %v226
    %v236 = vpop.permute.xlu0 %235
    %237 = vset.pattern.permute.xlu0 0
    %238 = vperm.xlu0 %237, %v227
    %v239 = vpop.permute.xlu0 %238
    %240 = vset.pattern.permute.xlu0 0
    %241 = vperm.xlu0 %240, %v228
    %v242 = vpop.permute.xlu0 %241
    %243 = vset.pattern.permute.xlu0 0
    %244 = vperm.xlu0 %243, %v229
    %v245 = vpop.permute.xlu0 %244
    %246 = vset.pattern.permute.xlu0 0
    %247 = vperm.xlu0 %246, %v230
    %v248 = vpop.permute.xlu0 %247
    %249 = vset.pattern.permute.xlu0 0
    %250 = vperm.xlu0 %249, %v231
    %v251 = vpop.permute.xlu0 %250
    %252 = vset.pattern.permute.xlu0 0
    %253 = vperm.xlu0 %252, %v232
    %v254 = vpop.permute.xlu0 %253
    %255 = vset.pattern.permute.xlu0 0
    %256 = vperm.xlu0 %255, %v233
    %v257 = vpop.permute.xlu0 %256
    %vm258 = vcmp.eq.s32.totalorder %v236, %v46
    %vm259 = vcmp.eq.s32.totalorder %v236, %v47
    %vm260 = vcmp.eq.s32.totalorder %v239, %v46
    %vm261 = vcmp.eq.s32.totalorder %v239, %v47
    %vm262 = vcmp.eq.s32.totalorder %v242, %v46
    %vm263 = vcmp.eq.s32.totalorder %v242, %v47
    %vm264 = vcmp.eq.s32.totalorder %v245, %v46
    %vm265 = vcmp.eq.s32.totalorder %v245, %v47
    %vm266 = vcmp.eq.s32.totalorder %v248, %v46
    %vm267 = vcmp.eq.s32.totalorder %v248, %v47
    %vm268 = vcmp.eq.s32.totalorder %v251, %v46
    %vm269 = vcmp.eq.s32.totalorder %v251, %v47
    %vm270 = vcmp.eq.s32.totalorder %v254, %v46
    %vm271 = vcmp.eq.s32.totalorder %v254, %v47
    %vm272 = vcmp.eq.s32.totalorder %v257, %v46
    %vm273 = vcmp.eq.s32.totalorder %v257, %v47
    %v274 = vsel %vm258, 1, 0
    %v275 = vsel %vm259, 1, 0
    %v276 = vsel %vm260, 1, 0
    %v277 = vsel %vm261, 1, 0
    %v278 = vsel %vm262, 1, 0
    %v279 = vsel %vm263, 1, 0
    %v280 = vsel %vm264, 1, 0
    %v281 = vsel %vm265, 1, 0
    %v282 = vsel %vm266, 1, 0
    %v283 = vsel %vm267, 1, 0
    %v284 = vsel %vm268, 1, 0
    %v285 = vsel %vm269, 1, 0
    %v286 = vsel %vm270, 1, 0
    %v287 = vsel %vm271, 1, 0
    %v288 = vsel %vm272, 1, 0
    %v289 = vsel %vm273, 1, 0
    %v290 = vcvt.s32.f32 %v274
    %v291 = vcvt.s32.f32 %v275
    %v292 = vcvt.s32.f32 %v276
    %v293 = vcvt.s32.f32 %v277
    %v294 = vcvt.s32.f32 %v278
    %v295 = vcvt.s32.f32 %v279
    %v296 = vcvt.s32.f32 %v280
    %v297 = vcvt.s32.f32 %v281
    %v298 = vcvt.s32.f32 %v282
    %v299 = vcvt.s32.f32 %v283
    %v300 = vcvt.s32.f32 %v284
    %v301 = vcvt.s32.f32 %v285
    %v302 = vcvt.s32.f32 %v286
    %v303 = vcvt.s32.f32 %v287
    %v304 = vcvt.s32.f32 %v288
    %v305 = vcvt.s32.f32 %v289
    %v306 = vadd.f32 %v209, %v290
    %v307 = vadd.f32 %v210, %v291
    %v308 = vadd.f32 %v211, %v292
    %v309 = vadd.f32 %v212, %v293
    %v310 = vadd.f32 %v213, %v294
    %v311 = vadd.f32 %v214, %v295
    %v312 = vadd.f32 %v215, %v296
    %v313 = vadd.f32 %v216, %v297
    %v314 = vadd.f32 %v217, %v298
    %v315 = vadd.f32 %v218, %v299
    %v316 = vadd.f32 %v219, %v300
    %v317 = vadd.f32 %v220, %v301
    %v318 = vadd.f32 %v221, %v302
    %v319 = vadd.f32 %v222, %v303
    %v320 = vadd.f32 %v223, %v304
    %v321 = vadd.f32 %v224, %v305
    %s322 = scalar_lea.vmem %s0, 192
    %v323 = vld [vmem:[%s322] sm:$0xff]
    %v324 = vld [vmem:[%s322 + $0x8] sm:$0xff]
    %v325 = vld [vmem:[%s322 + $0x10] sm:$0xff]
    %v326 = vld [vmem:[%s322 + $0x18] sm:$0xff]
    %v327 = vld [vmem:[%s322 + $0x20] sm:$0xff]
    %v328 = vld [vmem:[%s322 + $0x28] sm:$0xff]
    %v329 = vld [vmem:[%s322 + $0x30] sm:$0xff]
    %v330 = vld [vmem:[%s322 + $0x38] sm:$0xff]
    %331 = vset.pattern.permute.xlu0 0
    %332 = vperm.xlu0 %331, %v323
    %v333 = vpop.permute.xlu0 %332
    %334 = vset.pattern.permute.xlu0 0
    %335 = vperm.xlu0 %334, %v324
    %v336 = vpop.permute.xlu0 %335
    %337 = vset.pattern.permute.xlu0 0
    %338 = vperm.xlu0 %337, %v325
    %v339 = vpop.permute.xlu0 %338
    %340 = vset.pattern.permute.xlu0 0
    %341 = vperm.xlu0 %340, %v326
    %v342 = vpop.permute.xlu0 %341
    %343 = vset.pattern.permute.xlu0 0
    %344 = vperm.xlu0 %343, %v327
    %v345 = vpop.permute.xlu0 %344
    %346 = vset.pattern.permute.xlu0 0
    %347 = vperm.xlu0 %346, %v328
    %v348 = vpop.permute.xlu0 %347
    %349 = vset.pattern.permute.xlu0 0
    %350 = vperm.xlu0 %349, %v329
    %v351 = vpop.permute.xlu0 %350
    %352 = vset.pattern.permute.xlu0 0
    %353 = vperm.xlu0 %352, %v330
    %v354 = vpop.permute.xlu0 %353
    %vm355 = vcmp.eq.s32.totalorder %v333, %v46
    %vm356 = vcmp.eq.s32.totalorder %v333, %v47
    %vm357 = vcmp.eq.s32.totalorder %v336, %v46
    %vm358 = vcmp.eq.s32.totalorder %v336, %v47
    %vm359 = vcmp.eq.s32.totalorder %v339, %v46
    %vm360 = vcmp.eq.s32.totalorder %v339, %v47
    %vm361 = vcmp.eq.s32.totalorder %v342, %v46
    %vm362 = vcmp.eq.s32.totalorder %v342, %v47
    %vm363 = vcmp.eq.s32.totalorder %v345, %v46
    %vm364 = vcmp.eq.s32.totalorder %v345, %v47
    %vm365 = vcmp.eq.s32.totalorder %v348, %v46
    %vm366 = vcmp.eq.s32.totalorder %v348, %v47
    %vm367 = vcmp.eq.s32.totalorder %v351, %v46
    %vm368 = vcmp.eq.s32.totalorder %v351, %v47
    %vm369 = vcmp.eq.s32.totalorder %v354, %v46
    %vm370 = vcmp.eq.s32.totalorder %v354, %v47
    %v371 = vsel %vm355, 1, 0
    %v372 = vsel %vm356, 1, 0
    %v373 = vsel %vm357, 1, 0
    %v374 = vsel %vm358, 1, 0
    %v375 = vsel %vm359, 1, 0
    %v376 = vsel %vm360, 1, 0
    %v377 = vsel %vm361, 1, 0
    %v378 = vsel %vm362, 1, 0
    %v379 = vsel %vm363, 1, 0
    %v380 = vsel %vm364, 1, 0
    %v381 = vsel %vm365, 1, 0
    %v382 = vsel %vm366, 1, 0
    %v383 = vsel %vm367, 1, 0
    %v384 = vsel %vm368, 1, 0
    %v385 = vsel %vm369, 1, 0
    %v386 = vsel %vm370, 1, 0
    %v387 = vcvt.s32.f32 %v371
    %v388 = vcvt.s32.f32 %v372
    %v389 = vcvt.s32.f32 %v373
    %v390 = vcvt.s32.f32 %v374
    %v391 = vcvt.s32.f32 %v375
    %v392 = vcvt.s32.f32 %v376
    %v393 = vcvt.s32.f32 %v377
    %v394 = vcvt.s32.f32 %v378
    %v395 = vcvt.s32.f32 %v379
    %v396 = vcvt.s32.f32 %v380
    %v397 = vcvt.s32.f32 %v381
    %v398 = vcvt.s32.f32 %v382
    %v399 = vcvt.s32.f32 %v383
    %v400 = vcvt.s32.f32 %v384
    %v401 = vcvt.s32.f32 %v385
    %v402 = vcvt.s32.f32 %v386
    %v403 = vadd.f32 %v306, %v387
    %v404 = vadd.f32 %v307, %v388
    %v405 = vadd.f32 %v308, %v389
    %v406 = vadd.f32 %v309, %v390
    %v407 = vadd.f32 %v310, %v391
    %v408 = vadd.f32 %v311, %v392
    %v409 = vadd.f32 %v312, %v393
    %v410 = vadd.f32 %v313, %v394
    %v411 = vadd.f32 %v314, %v395
    %v412 = vadd.f32 %v315, %v396
    %v413 = vadd.f32 %v316, %v397
    %v414 = vadd.f32 %v317, %v398
    %v415 = vadd.f32 %v318, %v399
    %v416 = vadd.f32 %v319, %v400
    %v417 = vadd.f32 %v320, %v401
    %v418 = vadd.f32 %v321, %v402
    %v419 = vld [vmem:[#allocation3] sm:$0xff]
    %v420 = vld [vmem:[#allocation3 + $0x8] sm:$0xff]
    %v421 = vld [vmem:[#allocation3 + $0x10] sm:$0xff]
    %v422 = vld [vmem:[#allocation3 + $0x18] sm:$0xff]
    %v423 = vld [vmem:[#allocation3 + $0x20] sm:$0xff]
    %v424 = vld [vmem:[#allocation3 + $0x28] sm:$0xff]
    %v425 = vld [vmem:[#allocation3 + $0x30] sm:$0xff]
    %v426 = vld [vmem:[#allocation3 + $0x38] sm:$0xff]
    %v427 = vld [vmem:[#allocation3 + $0x40] sm:$0xff]
    %v428 = vld [vmem:[#allocation3 + $0x48] sm:$0xff]
    %v429 = vld [vmem:[#allocation3 + $0x50] sm:$0xff]
    %v430 = vld [vmem:[#allocation3 + $0x58] sm:$0xff]
    %v431 = vld [vmem:[#allocation3 + $0x60] sm:$0xff]
    %v432 = vld [vmem:[#allocation3 + $0x68] sm:$0xff]
    %v433 = vld [vmem:[#allocation3 + $0x70] sm:$0xff]
    %v434 = vld [vmem:[#allocation3 + $0x78] sm:$0xff]
    %v435 = vld [vmem:[#allocation3 + $0x80] sm:$0xff]
    %v436 = vld [vmem:[#allocation3 + $0x88] sm:$0xff]
    %v437 = vld [vmem:[#allocation3 + $0x90] sm:$0xff]
    %v438 = vld [vmem:[#allocation3 + $0x98] sm:$0xff]
    %v439 = vld [vmem:[#allocation3 + $0xa0] sm:$0xff]
    %v440 = vld [vmem:[#allocation3 + $0xa8] sm:$0xff]
    %v441 = vld [vmem:[#allocation3 + $0xb0] sm:$0xff]
    %v442 = vld [vmem:[#allocation3 + $0xb8] sm:$0xff]
    %v443 = vld [vmem:[#allocation3 + $0xc0] sm:$0xff]
    %v444 = vld [vmem:[#allocation3 + $0xc8] sm:$0xff]
    %v445 = vld [vmem:[#allocation3 + $0xd0] sm:$0xff]
    %v446 = vld [vmem:[#allocation3 + $0xd8] sm:$0xff]
    %v447 = vld [vmem:[#allocation3 + $0xe0] sm:$0xff]
    %v448 = vld [vmem:[#allocation3 + $0xe8] sm:$0xff]
    %v449 = vld [vmem:[#allocation3 + $0xf0] sm:$0xff]
    %v450 = vld [vmem:[#allocation3 + $0xf8] sm:$0xff]
    %v451 = vld [vmem:[#allocation3 + $0x100] sm:$0xff]
    %v452 = vld [vmem:[#allocation3 + $0x108] sm:$0xff]
    %v453 = vld [vmem:[#allocation3 + $0x110] sm:$0xff]
    %v454 = vld [vmem:[#allocation3 + $0x118] sm:$0xff]
    %v455 = vld [vmem:[#allocation3 + $0x120] sm:$0xff]
    %v456 = vld [vmem:[#allocation3 + $0x128] sm:$0xff]
    %v457 = vld [vmem:[#allocation3 + $0x130] sm:$0xff]
    %v458 = vld [vmem:[#allocation3 + $0x138] sm:$0xff]
    %v459 = vld [vmem:[#allocation3 + $0x140] sm:$0xff]
    %v460 = vld [vmem:[#allocation3 + $0x148] sm:$0xff]
    %v461 = vld [vmem:[#allocation3 + $0x150] sm:$0xff]
    %v462 = vld [vmem:[#allocation3 + $0x158] sm:$0xff]
    %v463 = vld [vmem:[#allocation3 + $0x160] sm:$0xff]
    %v464 = vld [vmem:[#allocation3 + $0x168] sm:$0xff]
    %v465 = vld [vmem:[#allocation3 + $0x170] sm:$0xff]
    %v466 = vld [vmem:[#allocation3 + $0x178] sm:$0xff]
    %v467 = vld [vmem:[#allocation3 + $0x180] sm:$0xff]
    %v468 = vld [vmem:[#allocation3 + $0x188] sm:$0xff]
    %v469 = vld [vmem:[#allocation3 + $0x190] sm:$0xff]
    %v470 = vld [vmem:[#allocation3 + $0x198] sm:$0xff]
    %v471 = vld [vmem:[#allocation3 + $0x1a0] sm:$0xff]
    %v472 = vld [vmem:[#allocation3 + $0x1a8] sm:$0xff]
    %v473 = vld [vmem:[#allocation3 + $0x1b0] sm:$0xff]
    %v474 = vld [vmem:[#allocation3 + $0x1b8] sm:$0xff]
    %v475 = vld [vmem:[#allocation3 + $0x1c0] sm:$0xff]
    %v476 = vld [vmem:[#allocation3 + $0x1c8] sm:$0xff]
    %v477 = vld [vmem:[#allocation3 + $0x1d0] sm:$0xff]
    %v478 = vld [vmem:[#allocation3 + $0x1d8] sm:$0xff]
    %v479 = vld [vmem:[#allocation3 + $0x1e0] sm:$0xff]
    %v480 = vld [vmem:[#allocation3 + $0x1e8] sm:$0xff]
    %v481 = vld [vmem:[#allocation3 + $0x1f0] sm:$0xff]
    %v482 = vld [vmem:[#allocation3 + $0x1f8] sm:$0xff]
    %v483 = vld [vmem:[#allocation3 + $0x200] sm:$0xff]
    %v484 = vld [vmem:[#allocation3 + $0x208] sm:$0xff]
    %v485 = vld [vmem:[#allocation3 + $0x210] sm:$0xff]
    %v486 = vld [vmem:[#allocation3 + $0x218] sm:$0xff]
    %v487 = vld [vmem:[#allocation3 + $0x220] sm:$0xff]
    %v488 = vld [vmem:[#allocation3 + $0x228] sm:$0xff]
    %v489 = vld [vmem:[#allocation3 + $0x230] sm:$0xff]
    %v490 = vld [vmem:[#allocation3 + $0x238] sm:$0xff]
    %v491 = vld [vmem:[#allocation3 + $0x240] sm:$0xff]
    %v492 = vld [vmem:[#allocation3 + $0x248] sm:$0xff]
    %v493 = vld [vmem:[#allocation3 + $0x250] sm:$0xff]
    %v494 = vld [vmem:[#allocation3 + $0x258] sm:$0xff]
    %v495 = vld [vmem:[#allocation3 + $0x260] sm:$0xff]
    %v496 = vld [vmem:[#allocation3 + $0x268] sm:$0xff]
    %v497 = vld [vmem:[#allocation3 + $0x270] sm:$0xff]
    %v498 = vld [vmem:[#allocation3 + $0x278] sm:$0xff]
    %v499 = vld [vmem:[#allocation3 + $0x280] sm:$0xff]
    %v500 = vld [vmem:[#allocation3 + $0x288] sm:$0xff]
    %v501 = vld [vmem:[#allocation3 + $0x290] sm:$0xff]
    %v502 = vld [vmem:[#allocation3 + $0x298] sm:$0xff]
    %v503 = vld [vmem:[#allocation3 + $0x2a0] sm:$0xff]
    %v504 = vld [vmem:[#allocation3 + $0x2a8] sm:$0xff]
    %v505 = vld [vmem:[#allocation3 + $0x2b0] sm:$0xff]
    %v506 = vld [vmem:[#allocation3 + $0x2b8] sm:$0xff]
    %v507 = vld [vmem:[#allocation3 + $0x2c0] sm:$0xff]
    %v508 = vld [vmem:[#allocation3 + $0x2c8] sm:$0xff]
    %v509 = vld [vmem:[#allocation3 + $0x2d0] sm:$0xff]
    %v510 = vld [vmem:[#allocation3 + $0x2d8] sm:$0xff]
    %v511 = vld [vmem:[#allocation3 + $0x2e0] sm:$0xff]
    %v512 = vld [vmem:[#allocation3 + $0x2e8] sm:$0xff]
    %v513 = vld [vmem:[#allocation3 + $0x2f0] sm:$0xff]
    %v514 = vld [vmem:[#allocation3 + $0x2f8] sm:$0xff]
    %515 = vmatpush.msra.mxu0 %v464
    %516 = vmatpush.msra.mxu0 %v461
    %517 = vmatpush.msra.mxu0 %v458
    %518 = vmatpush.msra.mxu0 %v455
    %519 = vmatpush.msra.mxu0 %v452
    %520 = vmatpush.msra.mxu0 %v449
    %521 = vmatpush.msra.mxu0 %v446
    %522 = vmatpush.msra.mxu0 %v443
    %523 = vmatpush.msra.mxu0 %v440
    %524 = vmatpush.msra.mxu0 %v437
    %525 = vmatpush.msra.mxu0 %v434
    %526 = vmatpush.msra.mxu0 %v431
    %527 = vmatpush.msra.mxu0 %v428
    %528 = vmatpush.msra.mxu0 %v425
    %529 = vmatpush.msra.mxu0 %v422
    %530 = vmatpush.msra.mxu0 %v419
    %531 = vmatmul.f32.gmra.mxu0 %v403
    %v532 = vpop.f32.mrf.mxu0
    %v533 = vadd.f32 0.0, %v532
    %534 = vmatmul.f32.gmra.mxu0 %v405
    %v535 = vpop.f32.mrf.mxu0
    %v536 = vadd.f32 0.0, %v535
    %537 = vmatmul.f32.gmra.mxu0 %v407
    %v538 = vpop.f32.mrf.mxu0
    %v539 = vadd.f32 0.0, %v538
    %540 = vmatmul.f32.gmra.mxu0 %v409
    %v541 = vpop.f32.mrf.mxu0
    %v542 = vadd.f32 0.0, %v541
    %543 = vmatmul.f32.gmra.mxu0 %v411
    %v544 = vpop.f32.mrf.mxu0
    %v545 = vadd.f32 0.0, %v544
    %546 = vmatmul.f32.gmra.mxu0 %v413
    %v547 = vpop.f32.mrf.mxu0
    %v548 = vadd.f32 0.0, %v547
    %549 = vmatmul.f32.gmra.mxu0 %v415
    %v550 = vpop.f32.mrf.mxu0
    %v551 = vadd.f32 0.0, %v550
    %552 = vmatmul.f32.gmra.mxu0 %v417
    %v553 = vpop.f32.mrf.mxu0
    %v554 = vadd.f32 0.0, %v553
    %555 = vdwg.mxu0
    %556 = vmatpush.msra.mxu0 %v512
    %557 = vmatpush.msra.mxu0 %v509
    %558 = vmatpush.msra.mxu0 %v506
    %559 = vmatpush.msra.mxu0 %v503
    %560 = vmatpush.msra.mxu0 %v500
    %561 = vmatpush.msra.mxu0 %v497
    %562 = vmatpush.msra.mxu0 %v494
    %563 = vmatpush.msra.mxu0 %v491
    %564 = vmatpush.msra.mxu0 %v488
    %565 = vmatpush.msra.mxu0 %v485
    %566 = vmatpush.msra.mxu0 %v482
    %567 = vmatpush.msra.mxu0 %v479
    %568 = vmatpush.msra.mxu0 %v476
    %569 = vmatpush.msra.mxu0 %v473
    %570 = vmatpush.msra.mxu0 %v470
    %571 = vmatpush.msra.mxu0 %v467
    %572 = vmatmul.f32.gmra.mxu0 %v404
    %v573 = vpop.f32.mrf.mxu0
    %v574 = vadd.f32 %v533, %v573
    %575 = vmatmul.f32.gmra.mxu0 %v406
    %v576 = vpop.f32.mrf.mxu0
    %v577 = vadd.f32 %v536, %v576
    %578 = vmatmul.f32.gmra.mxu0 %v408
    %v579 = vpop.f32.mrf.mxu0
    %v580 = vadd.f32 %v539, %v579
    %581 = vmatmul.f32.gmra.mxu0 %v410
    %v582 = vpop.f32.mrf.mxu0
    %v583 = vadd.f32 %v542, %v582
    %584 = vmatmul.f32.gmra.mxu0 %v412
    %v585 = vpop.f32.mrf.mxu0
    %v586 = vadd.f32 %v545, %v585
    %587 = vmatmul.f32.gmra.mxu0 %v414
    %v588 = vpop.f32.mrf.mxu0
    %v589 = vadd.f32 %v548, %v588
    %590 = vmatmul.f32.gmra.mxu0 %v416
    %v591 = vpop.f32.mrf.mxu0
    %v592 = vadd.f32 %v551, %v591
    %593 = vmatmul.f32.gmra.mxu0 %v418
    %v594 = vpop.f32.mrf.mxu0
    %v595 = vadd.f32 %v554, %v594
    %596 = vdwg.mxu0
    %597 = vmatpush.msra.mxu0 %v465
    %598 = vmatpush.msra.mxu0 %v462
    %599 = vmatpush.msra.mxu0 %v459
    %600 = vmatpush.msra.mxu0 %v456
    %601 = vmatpush.msra.mxu0 %v453
    %602 = vmatpush.msra.mxu0 %v450
    %603 = vmatpush.msra.mxu0 %v447
    %604 = vmatpush.msra.mxu0 %v444
    %605 = vmatpush.msra.mxu0 %v441
    %606 = vmatpush.msra.mxu0 %v438
    %607 = vmatpush.msra.mxu0 %v435
    %608 = vmatpush.msra.mxu0 %v432
    %609 = vmatpush.msra.mxu0 %v429
    %610 = vmatpush.msra.mxu0 %v426
    %611 = vmatpush.msra.mxu0 %v423
    %612 = vmatpush.msra.mxu0 %v420
    %613 = vmatmul.f32.gmra.mxu0 %v403
    %v614 = vpop.f32.mrf.mxu0
    %v615 = vadd.f32 0.0, %v614
    %616 = vmatmul.f32.gmra.mxu0 %v405
    %v617 = vpop.f32.mrf.mxu0
    %v618 = vadd.f32 0.0, %v617
    %619 = vmatmul.f32.gmra.mxu0 %v407
    %v620 = vpop.f32.mrf.mxu0
    %v621 = vadd.f32 0.0, %v620
    %622 = vmatmul.f32.gmra.mxu0 %v409
    %v623 = vpop.f32.mrf.mxu0
    %v624 = vadd.f32 0.0, %v623
    %625 = vmatmul.f32.gmra.mxu0 %v411
    %v626 = vpop.f32.mrf.mxu0
    %v627 = vadd.f32 0.0, %v626
    %628 = vmatmul.f32.gmra.mxu0 %v413
    %v629 = vpop.f32.mrf.mxu0
    %v630 = vadd.f32 0.0, %v629
    %631 = vmatmul.f32.gmra.mxu0 %v415
    %v632 = vpop.f32.mrf.mxu0
    %v633 = vadd.f32 0.0, %v632
    %634 = vmatmul.f32.gmra.mxu0 %v417
    %v635 = vpop.f32.mrf.mxu0
    %v636 = vadd.f32 0.0, %v635
    %637 = vdwg.mxu0
    %638 = vmatpush.msra.mxu0 %v513
    %639 = vmatpush.msra.mxu0 %v510
    %640 = vmatpush.msra.mxu0 %v507
    %641 = vmatpush.msra.mxu0 %v504
    %642 = vmatpush.msra.mxu0 %v501
    %643 = vmatpush.msra.mxu0 %v498
    %644 = vmatpush.msra.mxu0 %v495
    %645 = vmatpush.msra.mxu0 %v492
    %646 = vmatpush.msra.mxu0 %v489
    %647 = vmatpush.msra.mxu0 %v486
    %648 = vmatpush.msra.mxu0 %v483
    %649 = vmatpush.msra.mxu0 %v480
    %650 = vmatpush.msra.mxu0 %v477
    %651 = vmatpush.msra.mxu0 %v474
    %652 = vmatpush.msra.mxu0 %v471
    %653 = vmatpush.msra.mxu0 %v468
    %654 = vmatmul.f32.gmra.mxu0 %v404
    %v655 = vpop.f32.mrf.mxu0
    %v656 = vadd.f32 %v615, %v655
    %657 = vmatmul.f32.gmra.mxu0 %v406
    %v658 = vpop.f32.mrf.mxu0
    %v659 = vadd.f32 %v618, %v658
    %660 = vmatmul.f32.gmra.mxu0 %v408
    %v661 = vpop.f32.mrf.mxu0
    %v662 = vadd.f32 %v621, %v661
    %663 = vmatmul.f32.gmra.mxu0 %v410
    %v664 = vpop.f32.mrf.mxu0
    %v665 = vadd.f32 %v624, %v664
    %666 = vmatmul.f32.gmra.mxu0 %v412
    %v667 = vpop.f32.mrf.mxu0
    %v668 = vadd.f32 %v627, %v667
    %669 = vmatmul.f32.gmra.mxu0 %v414
    %v670 = vpop.f32.mrf.mxu0
    %v671 = vadd.f32 %v630, %v670
    %672 = vmatmul.f32.gmra.mxu0 %v416
    %v673 = vpop.f32.mrf.mxu0
    %v674 = vadd.f32 %v633, %v673
    %675 = vmatmul.f32.gmra.mxu0 %v418
    %v676 = vpop.f32.mrf.mxu0
    %v677 = vadd.f32 %v636, %v676
    %678 = vdwg.mxu0
    %679 = vmatpush.msra.mxu0 %v466
    %680 = vmatpush.msra.mxu0 %v463
    %681 = vmatpush.msra.mxu0 %v460
    %682 = vmatpush.msra.mxu0 %v457
    %683 = vmatpush.msra.mxu0 %v454
    %684 = vmatpush.msra.mxu0 %v451
    %685 = vmatpush.msra.mxu0 %v448
    %686 = vmatpush.msra.mxu0 %v445
    %687 = vmatpush.msra.mxu0 %v442
    %688 = vmatpush.msra.mxu0 %v439
    %689 = vmatpush.msra.mxu0 %v436
    %690 = vmatpush.msra.mxu0 %v433
    %691 = vmatpush.msra.mxu0 %v430
    %692 = vmatpush.msra.mxu0 %v427
    %693 = vmatpush.msra.mxu0 %v424
    %694 = vmatpush.msra.mxu0 %v421
    %695 = vmatmul.f32.gmra.mxu0 %v403
    %v696 = vpop.f32.mrf.mxu0
    %v697 = vadd.f32 0.0, %v696
    %698 = vmatmul.f32.gmra.mxu0 %v405
    %v699 = vpop.f32.mrf.mxu0
    %v700 = vadd.f32 0.0, %v699
    %701 = vmatmul.f32.gmra.mxu0 %v407
    %v702 = vpop.f32.mrf.mxu0
    %v703 = vadd.f32 0.0, %v702
    %704 = vmatmul.f32.gmra.mxu0 %v409
    %v705 = vpop.f32.mrf.mxu0
    %v706 = vadd.f32 0.0, %v705
    %707 = vmatmul.f32.gmra.mxu0 %v411
    %v708 = vpop.f32.mrf.mxu0
    %v709 = vadd.f32 0.0, %v708
    %710 = vmatmul.f32.gmra.mxu0 %v413
    %v711 = vpop.f32.mrf.mxu0
    %v712 = vadd.f32 0.0, %v711
    %713 = vmatmul.f32.gmra.mxu0 %v415
    %v714 = vpop.f32.mrf.mxu0
    %v715 = vadd.f32 0.0, %v714
    %716 = vmatmul.f32.gmra.mxu0 %v417
    %v717 = vpop.f32.mrf.mxu0
    %v718 = vadd.f32 0.0, %v717
    %719 = vdwg.mxu0
    %720 = vmatpush.msra.mxu0 %v514
    %721 = vmatpush.msra.mxu0 %v511
    %722 = vmatpush.msra.mxu0 %v508
    %723 = vmatpush.msra.mxu0 %v505
    %724 = vmatpush.msra.mxu0 %v502
    %725 = vmatpush.msra.mxu0 %v499
    %726 = vmatpush.msra.mxu0 %v496
    %727 = vmatpush.msra.mxu0 %v493
    %728 = vmatpush.msra.mxu0 %v490
    %729 = vmatpush.msra.mxu0 %v487
    %730 = vmatpush.msra.mxu0 %v484
    %731 = vmatpush.msra.mxu0 %v481
    %732 = vmatpush.msra.mxu0 %v478
    %733 = vmatpush.msra.mxu0 %v475
    %734 = vmatpush.msra.mxu0 %v472
    %735 = vmatpush.msra.mxu0 %v469
    %736 = vmatmul.f32.gmra.mxu0 %v404
    %v737 = vpop.f32.mrf.mxu0
    %v738 = vadd.f32 %v697, %v737
    %739 = vmatmul.f32.gmra.mxu0 %v406
    %v740 = vpop.f32.mrf.mxu0
    %v741 = vadd.f32 %v700, %v740
    %742 = vmatmul.f32.gmra.mxu0 %v408
    %v743 = vpop.f32.mrf.mxu0
    %v744 = vadd.f32 %v703, %v743
    %745 = vmatmul.f32.gmra.mxu0 %v410
    %v746 = vpop.f32.mrf.mxu0
    %v747 = vadd.f32 %v706, %v746
    %748 = vmatmul.f32.gmra.mxu0 %v412
    %v749 = vpop.f32.mrf.mxu0
    %v750 = vadd.f32 %v709, %v749
    %751 = vmatmul.f32.gmra.mxu0 %v414
    %v752 = vpop.f32.mrf.mxu0
    %v753 = vadd.f32 %v712, %v752
    %754 = vmatmul.f32.gmra.mxu0 %v416
    %v755 = vpop.f32.mrf.mxu0
    %v756 = vadd.f32 %v715, %v755
    %757 = vmatmul.f32.gmra.mxu0 %v418
    %v758 = vpop.f32.mrf.mxu0
    %v759 = vadd.f32 %v718, %v758
    %760 = vdwg.mxu0
    %761 = vst [vmem:[#allocation2] sm:$0xff] %v574
    %762 = vst [vmem:[#allocation2 + $0x8] sm:$0xff] %v656
    %763 = vst [vmem:[#allocation2 + $0x10] sm:$0xff] %v738
    %764 = vst [vmem:[#allocation2 + $0x18] sm:$0xff] %v577
    %765 = vst [vmem:[#allocation2 + $0x20] sm:$0xff] %v659
    %766 = vst [vmem:[#allocation2 + $0x28] sm:$0xff] %v741
    %767 = vst [vmem:[#allocation2 + $0x30] sm:$0xff] %v580
    %768 = vst [vmem:[#allocation2 + $0x38] sm:$0xff] %v662
    %769 = vst [vmem:[#allocation2 + $0x40] sm:$0xff] %v744
    %770 = vst [vmem:[#allocation2 + $0x48] sm:$0xff] %v583
    %771 = vst [vmem:[#allocation2 + $0x50] sm:$0xff] %v665
    %772 = vst [vmem:[#allocation2 + $0x58] sm:$0xff] %v747
    %773 = vst [vmem:[#allocation2 + $0x60] sm:$0xff] %v586
    %774 = vst [vmem:[#allocation2 + $0x68] sm:$0xff] %v668
    %775 = vst [vmem:[#allocation2 + $0x70] sm:$0xff] %v750
    %776 = vst [vmem:[#allocation2 + $0x78] sm:$0xff] %v589
    %777 = vst [vmem:[#allocation2 + $0x80] sm:$0xff] %v671
    %778 = vst [vmem:[#allocation2 + $0x88] sm:$0xff] %v753
    %779 = vst [vmem:[#allocation2 + $0x90] sm:$0xff] %v592
    %780 = vst [vmem:[#allocation2 + $0x98] sm:$0xff] %v674
    %781 = vst [vmem:[#allocation2 + $0xa0] sm:$0xff] %v756
    %782 = vst [vmem:[#allocation2 + $0xa8] sm:$0xff] %v595
    %783 = vst [vmem:[#allocation2 + $0xb0] sm:$0xff] %v677
    %784 = vst [vmem:[#allocation2 + $0xb8] sm:$0xff] %v759
    %v785 = vld [vmem:[%s4] sm:$0xff]
    %v786 = vld [vmem:[%s4 + $0x8] sm:$0xff]
    %v787 = vld [vmem:[%s4 + $0x10] sm:$0xff]
    %v788 = vld [vmem:[%s4 + $0x18] sm:$0xff]
    %v789 = vld [vmem:[%s4 + $0x20] sm:$0xff]
    %v790 = vld [vmem:[%s4 + $0x28] sm:$0xff]
    %v791 = vld [vmem:[%s4 + $0x30] sm:$0xff]
    %v792 = vld [vmem:[%s4 + $0x38] sm:$0xff]
    %v793 = vld [vmem:[%s4 + $0x40] sm:$0xff]
    %v794 = vld [vmem:[%s4 + $0x48] sm:$0xff]
    %v795 = vld [vmem:[%s4 + $0x50] sm:$0xff]
    %v796 = vld [vmem:[%s4 + $0x58] sm:$0xff]
    %v797 = vld [vmem:[%s4 + $0x60] sm:$0xff]
    %v798 = vld [vmem:[%s4 + $0x68] sm:$0xff]
    %v799 = vld [vmem:[%s4 + $0x70] sm:$0xff]
    %v800 = vld [vmem:[%s4 + $0x78] sm:$0xff]
    %v801 = vld [vmem:[%s4 + $0x80] sm:$0xff]
    %v802 = vld [vmem:[%s4 + $0x88] sm:$0xff]
    %v803 = vld [vmem:[%s4 + $0x90] sm:$0xff]
    %v804 = vld [vmem:[%s4 + $0x98] sm:$0xff]
    %v805 = vld [vmem:[%s4 + $0xa0] sm:$0xff]
    %v806 = vld [vmem:[%s4 + $0xa8] sm:$0xff]
    %v807 = vld [vmem:[%s4 + $0xb0] sm:$0xff]
    %v808 = vld [vmem:[%s4 + $0xb8] sm:$0xff]
    %v809 = vld [vmem:[%s4 + $0xc0] sm:$0xff]
    %v810 = vld [vmem:[%s4 + $0xc8] sm:$0xff]
    %v811 = vld [vmem:[%s4 + $0xd0] sm:$0xff]
    %v812 = vld [vmem:[%s4 + $0xd8] sm:$0xff]
    %v813 = vld [vmem:[%s4 + $0xe0] sm:$0xff]
    %v814 = vld [vmem:[%s4 + $0xe8] sm:$0xff]
    %v815 = vld [vmem:[%s4 + $0xf0] sm:$0xff]
    %v816 = vld [vmem:[%s4 + $0xf8] sm:$0xff]
    %v817 = vld [vmem:[%s4 + $0x100] sm:$0xff]
    %v818 = vld [vmem:[%s4 + $0x108] sm:$0xff]
    %v819 = vld [vmem:[%s4 + $0x110] sm:$0xff]
    %v820 = vld [vmem:[%s4 + $0x118] sm:$0xff]
    %v821 = vld [vmem:[%s4 + $0x120] sm:$0xff]
    %v822 = vld [vmem:[%s4 + $0x128] sm:$0xff]
    %v823 = vld [vmem:[%s4 + $0x130] sm:$0xff]
    %v824 = vld [vmem:[%s4 + $0x138] sm:$0xff]
    %v825 = vld [vmem:[%s4 + $0x140] sm:$0xff]
    %v826 = vld [vmem:[%s4 + $0x148] sm:$0xff]
    %v827 = vld [vmem:[%s4 + $0x150] sm:$0xff]
    %v828 = vld [vmem:[%s4 + $0x158] sm:$0xff]
    %v829 = vld [vmem:[%s4 + $0x160] sm:$0xff]
    %v830 = vld [vmem:[%s4 + $0x168] sm:$0xff]
    %v831 = vld [vmem:[%s4 + $0x170] sm:$0xff]
    %v832 = vld [vmem:[%s4 + $0x178] sm:$0xff]
    %v833 = vld [vmem:[%s5] sm:$0x7]
    %v835 = vperm.slane %v833, 0
    %v836 = vperm.slane %v833, 1
    %v837 = vperm.slane %v833, 2
    %v841 = vld [vmem:[%s1] sm:$0xff]
    %v842 = vld [vmem:[#allocation2] sm:$0xff]
    %v843 = vld [vmem:[#allocation2 + $0x8] sm:$0xff]
    %v844 = vld [vmem:[#allocation2 + $0x10] sm:$0xff]
    %845 = vmatpush.msra.mxu0 %v830
    %846 = vmatpush.msra.mxu0 %v827
    %847 = vmatpush.msra.mxu0 %v824
    %848 = vmatpush.msra.mxu0 %v821
    %849 = vmatpush.msra.mxu0 %v818
    %850 = vmatpush.msra.mxu0 %v815
    %851 = vmatpush.msra.mxu0 %v812
    %852 = vmatpush.msra.mxu0 %v809
    %853 = vmatpush.msra.mxu0 %v806
    %854 = vmatpush.msra.mxu0 %v803
    %855 = vmatpush.msra.mxu0 %v800
    %856 = vmatpush.msra.mxu0 %v797
    %857 = vmatpush.msra.mxu0 %v794
    %858 = vmatpush.msra.mxu0 %v791
    %859 = vmatpush.msra.mxu0 %v788
    %860 = vmatpush.msra.mxu0 %v785
    %861 = vmatmul.f32.gmra.mxu0 0.0
    %v862 = vpop.f32.mrf.mxu0
    %v863 = vadd.f32 %v835, %v862
    %864 = vdwg.mxu0
    %865 = vmatpush.msra.mxu0 %v831
    %866 = vmatpush.msra.mxu0 %v828
    %867 = vmatpush.msra.mxu0 %v825
    %868 = vmatpush.msra.mxu0 %v822
    %869 = vmatpush.msra.mxu0 %v819
    %870 = vmatpush.msra.mxu0 %v816
    %871 = vmatpush.msra.mxu0 %v813
    %872 = vmatpush.msra.mxu0 %v810
    %873 = vmatpush.msra.mxu0 %v807
    %874 = vmatpush.msra.mxu0 %v804
    %875 = vmatpush.msra.mxu0 %v801
    %876 = vmatpush.msra.mxu0 %v798
    %877 = vmatpush.msra.mxu0 %v795
    %878 = vmatpush.msra.mxu0 %v792
    %879 = vmatpush.msra.mxu0 %v789
    %880 = vmatpush.msra.mxu0 %v786
    %881 = vmatmul.f32.gmra.mxu0 0.0
    %v882 = vpop.f32.mrf.mxu0
    %v883 = vadd.f32 %v836, %v882
    %884 = vdwg.mxu0
    %885 = vmatpush.msra.mxu0 %v832
    %886 = vmatpush.msra.mxu0 %v829
    %887 = vmatpush.msra.mxu0 %v826
    %888 = vmatpush.msra.mxu0 %v823
    %889 = vmatpush.msra.mxu0 %v820
    %890 = vmatpush.msra.mxu0 %v817
    %891 = vmatpush.msra.mxu0 %v814
    %892 = vmatpush.msra.mxu0 %v811
    %893 = vmatpush.msra.mxu0 %v808
    %894 = vmatpush.msra.mxu0 %v805
    %895 = vmatpush.msra.mxu0 %v802
    %896 = vmatpush.msra.mxu0 %v799
    %897 = vmatpush.msra.mxu0 %v796
    %898 = vmatpush.msra.mxu0 %v793
    %899 = vmatpush.msra.mxu0 %v790
    %900 = vmatpush.msra.mxu0 %v787
    %901 = vmatmul.f32.gmra.mxu0 0.0
    %v902 = vpop.f32.mrf.mxu0
    %v903 = vadd.f32 %v837, %v902
    %904 = vdwg.mxu0
    %v905 = vadd.f32 %v842, %v863
    %v906 = vxor.u32 %v905, 2147483648
    %v907 = vmul.f32 %v906, 1.442695
    %v908 = vpow.pop %v907
    %v909 = vadd.f32 %v908, 1.0
    %v910 = vrcp.pop %v909
    %v911 = vmul.f32 %v909, %v910
    %v912 = vsub.f32 1.0, %v911
    %v913 = vmul.f32 %v910, %v912
    %v914 = vadd.f32 %v910, %v913
    %vm915 = vweird.f32 %v909
    %vm916 = vweird.f32 %v910
    %vm917 = vmor %vm915, %vm916
    %v918 = vsel %vm917, %v910, %v914
    %v919 = vand.u32 2147483647, %v909
    %vm920 = vcmp.eq.f32.partialorder %v919, 8.507059e+37
    %v921 = vand.u32 %v909, 2147483648
    %v922 = vor.u32 1.1754944e-38, %v921
    %v923 = vsel %vm920, %v922, %v918
    %v924 = vmul.f32 1.0, %v923
    %v925 = vadd.f32 %v843, %v883
    %v926 = vxor.u32 %v925, 2147483648
    %v927 = vmul.f32 %v926, 1.442695
    %v928 = vpow.pop %v927
    %v929 = vadd.f32 %v928, 1.0
    %v930 = vrcp.pop %v929
    %v931 = vmul.f32 %v929, %v930
    %v932 = vsub.f32 1.0, %v931
    %v933 = vmul.f32 %v930, %v932
    %v934 = vadd.f32 %v930, %v933
    %vm935 = vweird.f32 %v929
    %vm936 = vweird.f32 %v930
    %vm937 = vmor %vm935, %vm936
    %v938 = vsel %vm937, %v930, %v934
    %v939 = vand.u32 2147483647, %v929
    %vm940 = vcmp.eq.f32.partialorder %v939, 8.507059e+37
    %v941 = vand.u32 %v929, 2147483648
    %v942 = vor.u32 1.1754944e-38, %v941
    %v943 = vsel %vm940, %v942, %v938
    %v944 = vmul.f32 1.0, %v943
    %v945 = vmul.f32 %v924, %v903
    %v946 = vadd.f32 %v844, %v945
    %v947 = vtanh.pop %v946
    %v948 = vsub.f32 1.0, %v944
    %v949 = vmul.f32 %v948, %v947
    %v950 = vmul.f32 %v944, 0.0
    %v951 = vadd.f32 %v949, %v950
    %vm952 = vcmp.gt.s32.totalorder %v841, 0
    %v953 = vsel %vm952, %v951, 0.0
    %v954 = vld [vmem:[#allocation2 + $0x18] sm:$0xff]
    %v955 = vld [vmem:[#allocation2 + $0x20] sm:$0xff]
    %v956 = vld [vmem:[#allocation2 + $0x28] sm:$0xff]
    %957 = vmatpush.msra.mxu0 %v830
    %958 = vmatpush.msra.mxu0 %v827
    %959 = vmatpush.msra.mxu0 %v824
    %960 = vmatpush.msra.mxu0 %v821
    %961 = vmatpush.msra.mxu0 %v818
    %962 = vmatpush.msra.mxu0 %v815
    %963 = vmatpush.msra.mxu0 %v812
    %964 = vmatpush.msra.mxu0 %v809
    %965 = vmatpush.msra.mxu0 %v806
    %966 = vmatpush.msra.mxu0 %v803
    %967 = vmatpush.msra.mxu0 %v800
    %968 = vmatpush.msra.mxu0 %v797
    %969 = vmatpush.msra.mxu0 %v794
    %970 = vmatpush.msra.mxu0 %v791
    %971 = vmatpush.msra.mxu0 %v788
    %972 = vmatpush.msra.mxu0 %v785
    %973 = vmatmul.f32.gmra.mxu0 %v953
    %v974 = vpop.f32.mrf.mxu0
    %v975 = vadd.f32 %v835, %v974
    %976 = vdwg.mxu0
    %977 = vmatpush.msra.mxu0 %v831
    %978 = vmatpush.msra.mxu0 %v828
    %979 = vmatpush.msra.mxu0 %v825
    %980 = vmatpush.msra.mxu0 %v822
    %981 = vmatpush.msra.mxu0 %v819
    %982 = vmatpush.msra.mxu0 %v816
    %983 = vmatpush.msra.mxu0 %v813
    %984 = vmatpush.msra.mxu0 %v810
    %985 = vmatpush.msra.mxu0 %v807
    %986 = vmatpush.msra.mxu0 %v804
    %987 = vmatpush.msra.mxu0 %v801
    %988 = vmatpush.msra.mxu0 %v798
    %989 = vmatpush.msra.mxu0 %v795
    %990 = vmatpush.msra.mxu0 %v792
    %991 = vmatpush.msra.mxu0 %v789
    %992 = vmatpush.msra.mxu0 %v786
    %993 = vmatmul.f32.gmra.mxu0 %v953
    %v994 = vpop.f32.mrf.mxu0
    %v995 = vadd.f32 %v836, %v994
    %996 = vdwg.mxu0
    %997 = vmatpush.msra.mxu0 %v832
    %998 = vmatpush.msra.mxu0 %v829
    %999 = vmatpush.msra.mxu0 %v826
    %1000 = vmatpush.msra.mxu0 %v823
    %1001 = vmatpush.msra.mxu0 %v820
    %1002 = vmatpush.msra.mxu0 %v817
    %1003 = vmatpush.msra.mxu0 %v814
    %1004 = vmatpush.msra.mxu0 %v811
    %1005 = vmatpush.msra.mxu0 %v808
    %1006 = vmatpush.msra.mxu0 %v805
    %1007 = vmatpush.msra.mxu0 %v802
    %1008 = vmatpush.msra.mxu0 %v799
    %1009 = vmatpush.msra.mxu0 %v796
    %1010 = vmatpush.msra.mxu0 %v793
    %1011 = vmatpush.msra.mxu0 %v790
    %1012 = vmatpush.msra.mxu0 %v787
    %1013 = vmatmul.f32.gmra.mxu0 %v953
    %v1014 = vpop.f32.mrf.mxu0
    %v1015 = vadd.f32 %v837, %v1014
    %1016 = vdwg.mxu0
    %v1017 = vadd.f32 %v954, %v975
    %v1018 = vxor.u32 %v1017, 2147483648
    %v1019 = vmul.f32 %v1018, 1.442695
    %v1020 = vpow.pop %v1019
    %v1021 = vadd.f32 %v1020, 1.0
    %v1022 = vrcp.pop %v1021
    %v1023 = vmul.f32 %v1021, %v1022
    %v1024 = vsub.f32 1.0, %v1023
    %v1025 = vmul.f32 %v1022, %v1024
    %v1026 = vadd.f32 %v1022, %v1025
    %vm1027 = vweird.f32 %v1021
    %vm1028 = vweird.f32 %v1022
    %vm1029 = vmor %vm1027, %vm1028
    %v1030 = vsel %vm1029, %v1022, %v1026
    %v1031 = vand.u32 2147483647, %v1021
    %vm1032 = vcmp.eq.f32.partialorder %v1031, 8.507059e+37
    %v1033 = vand.u32 %v1021, 2147483648
    %v1034 = vor.u32 1.1754944e-38, %v1033
    %v1035 = vsel %vm1032, %v1034, %v1030
    %v1036 = vmul.f32 1.0, %v1035
    %v1037 = vadd.f32 %v955, %v995
    %v1038 = vxor.u32 %v1037, 2147483648
    %v1039 = vmul.f32 %v1038, 1.442695
    %v1040 = vpow.pop %v1039
    %v1041 = vadd.f32 %v1040, 1.0
    %v1042 = vrcp.pop %v1041
    %v1043 = vmul.f32 %v1041, %v1042
    %v1044 = vsub.f32 1.0, %v1043
    %v1045 = vmul.f32 %v1042, %v1044
    %v1046 = vadd.f32 %v1042, %v1045
    %vm1047 = vweird.f32 %v1041
    %vm1048 = vweird.f32 %v1042
    %vm1049 = vmor %vm1047, %vm1048
    %v1050 = vsel %vm1049, %v1042, %v1046
    %v1051 = vand.u32 2147483647, %v1041
    %vm1052 = vcmp.eq.f32.partialorder %v1051, 8.507059e+37
    %v1053 = vand.u32 %v1041, 2147483648
    %v1054 = vor.u32 1.1754944e-38, %v1053
    %v1055 = vsel %vm1052, %v1054, %v1050
    %v1056 = vmul.f32 1.0, %v1055
    %v1057 = vmul.f32 %v1036, %v1015
    %v1058 = vadd.f32 %v956, %v1057
    %v1059 = vtanh.pop %v1058
    %v1060 = vsub.f32 1.0, %v1056
    %v1061 = vmul.f32 %v1060, %v1059
    %v1062 = vmul.f32 %v1056, %v953
    %v1063 = vadd.f32 %v1061, %v1062
    %vm1064 = vcmp.gt.s32.totalorder %v841, 1
    %v1065 = vsel %vm1064, %v1063, %v953
    %v1066 = vld [vmem:[#allocation2 + $0x30] sm:$0xff]
    %v1067 = vld [vmem:[#allocation2 + $0x38] sm:$0xff]
    %v1068 = vld [vmem:[#allocation2 + $0x40] sm:$0xff]
    %1069 = vmatpush.msra.mxu0 %v830
    %1070 = vmatpush.msra.mxu0 %v827
    %1071 = vmatpush.msra.mxu0 %v824
    %1072 = vmatpush.msra.mxu0 %v821
    %1073 = vmatpush.msra.mxu0 %v818
    %1074 = vmatpush.msra.mxu0 %v815
    %1075 = vmatpush.msra.mxu0 %v812
    %1076 = vmatpush.msra.mxu0 %v809
    %1077 = vmatpush.msra.mxu0 %v806
    %1078 = vmatpush.msra.mxu0 %v803
    %1079 = vmatpush.msra.mxu0 %v800
    %1080 = vmatpush.msra.mxu0 %v797
    %1081 = vmatpush.msra.mxu0 %v794
    %1082 = vmatpush.msra.mxu0 %v791
    %1083 = vmatpush.msra.mxu0 %v788
    %1084 = vmatpush.msra.mxu0 %v785
    %1085 = vmatmul.f32.gmra.mxu0 %v1065
    %v1086 = vpop.f32.mrf.mxu0
    %v1087 = vadd.f32 %v835, %v1086
    %1088 = vdwg.mxu0
    %1089 = vmatpush.msra.mxu0 %v831
    %1090 = vmatpush.msra.mxu0 %v828
    %1091 = vmatpush.msra.mxu0 %v825
    %1092 = vmatpush.msra.mxu0 %v822
    %1093 = vmatpush.msra.mxu0 %v819
    %1094 = vmatpush.msra.mxu0 %v816
    %1095 = vmatpush.msra.mxu0 %v813
    %1096 = vmatpush.msra.mxu0 %v810
    %1097 = vmatpush.msra.mxu0 %v807
    %1098 = vmatpush.msra.mxu0 %v804
    %1099 = vmatpush.msra.mxu0 %v801
    %1100 = vmatpush.msra.mxu0 %v798
    %1101 = vmatpush.msra.mxu0 %v795
    %1102 = vmatpush.msra.mxu0 %v792
    %1103 = vmatpush.msra.mxu0 %v789
    %1104 = vmatpush.msra.mxu0 %v786
    %1105 = vmatmul.f32.gmra.mxu0 %v1065
    %v1106 = vpop.f32.mrf.mxu0
    %v1107 = vadd.f32 %v836, %v1106
    %1108 = vdwg.mxu0
    %1109 = vmatpush.msra.mxu0 %v832
    %1110 = vmatpush.msra.mxu0 %v829
    %1111 = vmatpush.msra.mxu0 %v826
    %1112 = vmatpush.msra.mxu0 %v823
    %1113 = vmatpush.msra.mxu0 %v820
    %1114 = vmatpush.msra.mxu0 %v817
    %1115 = vmatpush.msra.mxu0 %v814
    %1116 = vmatpush.msra.mxu0 %v811
    %1117 = vmatpush.msra.mxu0 %v808
    %1118 = vmatpush.msra.mxu0 %v805
    %1119 = vmatpush.msra.mxu0 %v802
    %1120 = vmatpush.msra.mxu0 %v799
    %1121 = vmatpush.msra.mxu0 %v796
    %1122 = vmatpush.msra.mxu0 %v793
    %1123 = vmatpush.msra.mxu0 %v790
    %1124 = vmatpush.msra.mxu0 %v787
    %1125 = vmatmul.f32.gmra.mxu0 %v1065
    %v1126 = vpop.f32.mrf.mxu0
    %v1127 = vadd.f32 %v837, %v1126
    %1128 = vdwg.mxu0
    %v1129 = vadd.f32 %v1066, %v1087
    %v1130 = vxor.u32 %v1129, 2147483648
    %v1131 = vmul.f32 %v1130, 1.442695
    %v1132 = vpow.pop %v1131
    %v1133 = vadd.f32 %v1132, 1.0
    %v1134 = vrcp.pop %v1133
    %v1135 = vmul.f32 %v1133, %v1134
    %v1136 = vsub.f32 1.0, %v1135
    %v1137 = vmul.f32 %v1134, %v1136
    %v1138 = vadd.f32 %v1134, %v1137
    %vm1139 = vweird.f32 %v1133
    %vm1140 = vweird.f32 %v1134
    %vm1141 = vmor %vm1139, %vm1140
    %v1142 = vsel %vm1141, %v1134, %v1138
    %v1143 = vand.u32 2147483647, %v1133
    %vm1144 = vcmp.eq.f32.partialorder %v1143, 8.507059e+37
    %v1145 = vand.u32 %v1133, 2147483648
    %v1146 = vor.u32 1.1754944e-38, %v1145
    %v1147 = vsel %vm1144, %v1146, %v1142
    %v1148 = vmul.f32 1.0, %v1147
    %v1149 = vadd.f32 %v1067, %v1107
    %v1150 = vxor.u32 %v1149, 2147483648
    %v1151 = vmul.f32 %v1150, 1.442695
    %v1152 = vpow.pop %v1151
    %v1153 = vadd.f32 %v1152, 1.0
    %v1154 = vrcp.pop %v1153
    %v1155 = vmul.f32 %v1153, %v1154
    %v1156 = vsub.f32 1.0, %v1155
    %v1157 = vmul.f32 %v1154, %v1156
    %v1158 = vadd.f32 %v1154, %v1157
    %vm1159 = vweird.f32 %v1153
    %vm1160 = vweird.f32 %v1154
    %vm1161 = vmor %vm1159, %vm1160
    %v1162 = vsel %vm1161, %v1154, %v1158
    %v1163 = vand.u32 2147483647, %v1153
    %vm1164 = vcmp.eq.f32.partialorder %v1163, 8.507059e+37
    %v1165 = vand.u32 %v1153, 2147483648
    %v1166 = vor.u32 1.1754944e-38, %v1165
    %v1167 = vsel %vm1164, %v1166, %v1162
    %v1168 = vmul.f32 1.0, %v1167
    %v1169 = vmul.f32 %v1148, %v1127
    %v1170 = vadd.f32 %v1068, %v1169
    %v1171 = vtanh.pop %v1170
    %v1172 = vsub.f32 1.0, %v1168
    %v1173 = vmul.f32 %v1172, %v1171
    %v1174 = vmul.f32 %v1168, %v1065
    %v1175 = vadd.f32 %v1173, %v1174
    %vm1176 = vcmp.gt.s32.totalorder %v841, 2
    %v1177 = vsel %vm1176, %v1175, %v1065
    %v1178 = vld [vmem:[#allocation2 + $0x48] sm:$0xff]
    %v1179 = vld [vmem:[#allocation2 + $0x50] sm:$0xff]
    %v1180 = vld [vmem:[#allocation2 + $0x58] sm:$0xff]
    %1181 = vmatpush.msra.mxu0 %v830
    %1182 = vmatpush.msra.mxu0 %v827
    %1183 = vmatpush.msra.mxu0 %v824
    %1184 = vmatpush.msra.mxu0 %v821
    %1185 = vmatpush.msra.mxu0 %v818
    %1186 = vmatpush.msra.mxu0 %v815
    %1187 = vmatpush.msra.mxu0 %v812
    %1188 = vmatpush.msra.mxu0 %v809
    %1189 = vmatpush.msra.mxu0 %v806
    %1190 = vmatpush.msra.mxu0 %v803
    %1191 = vmatpush.msra.mxu0 %v800
    %1192 = vmatpush.msra.mxu0 %v797
    %1193 = vmatpush.msra.mxu0 %v794
    %1194 = vmatpush.msra.mxu0 %v791
    %1195 = vmatpush.msra.mxu0 %v788
    %1196 = vmatpush.msra.mxu0 %v785
    %1197 = vmatmul.f32.gmra.mxu0 %v1177
    %v1198 = vpop.f32.mrf.mxu0
    %v1199 = vadd.f32 %v835, %v1198
    %1200 = vdwg.mxu0
    %1201 = vmatpush.msra.mxu0 %v831
    %1202 = vmatpush.msra.mxu0 %v828
    %1203 = vmatpush.msra.mxu0 %v825
    %1204 = vmatpush.msra.mxu0 %v822
    %1205 = vmatpush.msra.mxu0 %v819
    %1206 = vmatpush.msra.mxu0 %v816
    %1207 = vmatpush.msra.mxu0 %v813
    %1208 = vmatpush.msra.mxu0 %v810
    %1209 = vmatpush.msra.mxu0 %v807
    %1210 = vmatpush.msra.mxu0 %v804
    %1211 = vmatpush.msra.mxu0 %v801
    %1212 = vmatpush.msra.mxu0 %v798
    %1213 = vmatpush.msra.mxu0 %v795
    %1214 = vmatpush.msra.mxu0 %v792
    %1215 = vmatpush.msra.mxu0 %v789
    %1216 = vmatpush.msra.mxu0 %v786
    %1217 = vmatmul.f32.gmra.mxu0 %v1177
    %v1218 = vpop.f32.mrf.mxu0
    %v1219 = vadd.f32 %v836, %v1218
    %1220 = vdwg.mxu0
    %1221 = vmatpush.msra.mxu0 %v832
    %1222 = vmatpush.msra.mxu0 %v829
    %1223 = vmatpush.msra.mxu0 %v826
    %1224 = vmatpush.msra.mxu0 %v823
    %1225 = vmatpush.msra.mxu0 %v820
    %1226 = vmatpush.msra.mxu0 %v817
    %1227 = vmatpush.msra.mxu0 %v814
    %1228 = vmatpush.msra.mxu0 %v811
    %1229 = vmatpush.msra.mxu0 %v808
    %1230 = vmatpush.msra.mxu0 %v805
    %1231 = vmatpush.msra.mxu0 %v802
    %1232 = vmatpush.msra.mxu0 %v799
    %1233 = vmatpush.msra.mxu0 %v796
    %1234 = vmatpush.msra.mxu0 %v793
    %1235 = vmatpush.msra.mxu0 %v790
    %1236 = vmatpush.msra.mxu0 %v787
    %1237 = vmatmul.f32.gmra.mxu0 %v1177
    %v1238 = vpop.f32.mrf.mxu0
    %v1239 = vadd.f32 %v837, %v1238
    %1240 = vdwg.mxu0
    %v1241 = vadd.f32 %v1178, %v1199
    %v1242 = vxor.u32 %v1241, 2147483648
    %v1243 = vmul.f32 %v1242, 1.442695
    %v1244 = vpow.pop %v1243
    %v1245 = vadd.f32 %v1244, 1.0
    %v1246 = vrcp.pop %v1245
    %v1247 = vmul.f32 %v1245, %v1246
    %v1248 = vsub.f32 1.0, %v1247
    %v1249 = vmul.f32 %v1246, %v1248
    %v1250 = vadd.f32 %v1246, %v1249
    %vm1251 = vweird.f32 %v1245
    %vm1252 = vweird.f32 %v1246
    %vm1253 = vmor %vm1251, %vm1252
    %v1254 = vsel %vm1253, %v1246, %v1250
    %v1255 = vand.u32 2147483647, %v1245
    %vm1256 = vcmp.eq.f32.partialorder %v1255, 8.507059e+37
    %v1257 = vand.u32 %v1245, 2147483648
    %v1258 = vor.u32 1.1754944e-38, %v1257
    %v1259 = vsel %vm1256, %v1258, %v1254
    %v1260 = vmul.f32 1.0, %v1259
    %v1261 = vadd.f32 %v1179, %v1219
    %v1262 = vxor.u32 %v1261, 2147483648
    %v1263 = vmul.f32 %v1262, 1.442695
    %v1264 = vpow.pop %v1263
    %v1265 = vadd.f32 %v1264, 1.0
    %v1266 = vrcp.pop %v1265
    %v1267 = vmul.f32 %v1265, %v1266
    %v1268 = vsub.f32 1.0, %v1267
    %v1269 = vmul.f32 %v1266, %v1268
    %v1270 = vadd.f32 %v1266, %v1269
    %vm1271 = vweird.f32 %v1265
    %vm1272 = vweird.f32 %v1266
    %vm1273 = vmor %vm1271, %vm1272
    %v1274 = vsel %vm1273, %v1266, %v1270
    %v1275 = vand.u32 2147483647, %v1265
    %vm1276 = vcmp.eq.f32.partialorder %v1275, 8.507059e+37
    %v1277 = vand.u32 %v1265, 2147483648
    %v1278 = vor.u32 1.1754944e-38, %v1277
    %v1279 = vsel %vm1276, %v1278, %v1274
    %v1280 = vmul.f32 1.0, %v1279
    %v1281 = vmul.f32 %v1260, %v1239
    %v1282 = vadd.f32 %v1180, %v1281
    %v1283 = vtanh.pop %v1282
    %v1284 = vsub.f32 1.0, %v1280
    %v1285 = vmul.f32 %v1284, %v1283
    %v1286 = vmul.f32 %v1280, %v1177
    %v1287 = vadd.f32 %v1285, %v1286
    %vm1288 = vcmp.gt.s32.totalorder %v841, 3
    %v1289 = vsel %vm1288, %v1287, %v1177
    %v1290 = vld [vmem:[#allocation2 + $0x60] sm:$0xff]
    %v1291 = vld [vmem:[#allocation2 + $0x68] sm:$0xff]
    %v1292 = vld [vmem:[#allocation2 + $0x70] sm:$0xff]
    %1293 = vmatpush.msra.mxu0 %v830
    %1294 = vmatpush.msra.mxu0 %v827
    %1295 = vmatpush.msra.mxu0 %v824
    %1296 = vmatpush.msra.mxu0 %v821
    %1297 = vmatpush.msra.mxu0 %v818
    %1298 = vmatpush.msra.mxu0 %v815
    %1299 = vmatpush.msra.mxu0 %v812
    %1300 = vmatpush.msra.mxu0 %v809
    %1301 = vmatpush.msra.mxu0 %v806
    %1302 = vmatpush.msra.mxu0 %v803
    %1303 = vmatpush.msra.mxu0 %v800
    %1304 = vmatpush.msra.mxu0 %v797
    %1305 = vmatpush.msra.mxu0 %v794
    %1306 = vmatpush.msra.mxu0 %v791
    %1307 = vmatpush.msra.mxu0 %v788
    %1308 = vmatpush.msra.mxu0 %v785
    %1309 = vmatmul.f32.gmra.mxu0 %v1289
    %v1310 = vpop.f32.mrf.mxu0
    %v1311 = vadd.f32 %v835, %v1310
    %1312 = vdwg.mxu0
    %1313 = vmatpush.msra.mxu0 %v831
    %1314 = vmatpush.msra.mxu0 %v828
    %1315 = vmatpush.msra.mxu0 %v825
    %1316 = vmatpush.msra.mxu0 %v822
    %1317 = vmatpush.msra.mxu0 %v819
    %1318 = vmatpush.msra.mxu0 %v816
    %1319 = vmatpush.msra.mxu0 %v813
    %1320 = vmatpush.msra.mxu0 %v810
    %1321 = vmatpush.msra.mxu0 %v807
    %1322 = vmatpush.msra.mxu0 %v804
    %1323 = vmatpush.msra.mxu0 %v801
    %1324 = vmatpush.msra.mxu0 %v798
    %1325 = vmatpush.msra.mxu0 %v795
    %1326 = vmatpush.msra.mxu0 %v792
    %1327 = vmatpush.msra.mxu0 %v789
    %1328 = vmatpush.msra.mxu0 %v786
    %1329 = vmatmul.f32.gmra.mxu0 %v1289
    %v1330 = vpop.f32.mrf.mxu0
    %v1331 = vadd.f32 %v836, %v1330
    %1332 = vdwg.mxu0
    %1333 = vmatpush.msra.mxu0 %v832
    %1334 = vmatpush.msra.mxu0 %v829
    %1335 = vmatpush.msra.mxu0 %v826
    %1336 = vmatpush.msra.mxu0 %v823
    %1337 = vmatpush.msra.mxu0 %v820
    %1338 = vmatpush.msra.mxu0 %v817
    %1339 = vmatpush.msra.mxu0 %v814
    %1340 = vmatpush.msra.mxu0 %v811
    %1341 = vmatpush.msra.mxu0 %v808
    %1342 = vmatpush.msra.mxu0 %v805
    %1343 = vmatpush.msra.mxu0 %v802
    %1344 = vmatpush.msra.mxu0 %v799
    %1345 = vmatpush.msra.mxu0 %v796
    %1346 = vmatpush.msra.mxu0 %v793
    %1347 = vmatpush.msra.mxu0 %v790
    %1348 = vmatpush.msra.mxu0 %v787
    %1349 = vmatmul.f32.gmra.mxu0 %v1289
    %v1350 = vpop.f32.mrf.mxu0
    %v1351 = vadd.f32 %v837, %v1350
    %1352 = vdwg.mxu0
    %v1353 = vadd.f32 %v1290, %v1311
    %v1354 = vxor.u32 %v1353, 2147483648
    %v1355 = vmul.f32 %v1354, 1.442695
    %v1356 = vpow.pop %v1355
    %v1357 = vadd.f32 %v1356, 1.0
    %v1358 = vrcp.pop %v1357
    %v1359 = vmul.f32 %v1357, %v1358
    %v1360 = vsub.f32 1.0, %v1359
    %v1361 = vmul.f32 %v1358, %v1360
    %v1362 = vadd.f32 %v1358, %v1361
    %vm1363 = vweird.f32 %v1357
    %vm1364 = vweird.f32 %v1358
    %vm1365 = vmor %vm1363, %vm1364
    %v1366 = vsel %vm1365, %v1358, %v1362
    %v1367 = vand.u32 2147483647, %v1357
    %vm1368 = vcmp.eq.f32.partialorder %v1367, 8.507059e+37
    %v1369 = vand.u32 %v1357, 2147483648
    %v1370 = vor.u32 1.1754944e-38, %v1369
    %v1371 = vsel %vm1368, %v1370, %v1366
    %v1372 = vmul.f32 1.0, %v1371
    %v1373 = vadd.f32 %v1291, %v1331
    %v1374 = vxor.u32 %v1373, 2147483648
    %v1375 = vmul.f32 %v1374, 1.442695
    %v1376 = vpow.pop %v1375
    %v1377 = vadd.f32 %v1376, 1.0
    %v1378 = vrcp.pop %v1377
    %v1379 = vmul.f32 %v1377, %v1378
    %v1380 = vsub.f32 1.0, %v1379
    %v1381 = vmul.f32 %v1378, %v1380
    %v1382 = vadd.f32 %v1378, %v1381
    %vm1383 = vweird.f32 %v1377
    %vm1384 = vweird.f32 %v1378
    %vm1385 = vmor %vm1383, %vm1384
    %v1386 = vsel %vm1385, %v1378, %v1382
    %v1387 = vand.u32 2147483647, %v1377
    %vm1388 = vcmp.eq.f32.partialorder %v1387, 8.507059e+37
    %v1389 = vand.u32 %v1377, 2147483648
    %v1390 = vor.u32 1.1754944e-38, %v1389
    %v1391 = vsel %vm1388, %v1390, %v1386
    %v1392 = vmul.f32 1.0, %v1391
    %v1393 = vmul.f32 %v1372, %v1351
    %v1394 = vadd.f32 %v1292, %v1393
    %v1395 = vtanh.pop %v1394
    %v1396 = vsub.f32 1.0, %v1392
    %v1397 = vmul.f32 %v1396, %v1395
    %v1398 = vmul.f32 %v1392, %v1289
    %v1399 = vadd.f32 %v1397, %v1398
    %vm1400 = vcmp.gt.s32.totalorder %v841, 4
    %v1401 = vsel %vm1400, %v1399, %v1289
    %v1402 = vld [vmem:[#allocation2 + $0x78] sm:$0xff]
    %v1403 = vld [vmem:[#allocation2 + $0x80] sm:$0xff]
    %v1404 = vld [vmem:[#allocation2 + $0x88] sm:$0xff]
    %1405 = vmatpush.msra.mxu0 %v830
    %1406 = vmatpush.msra.mxu0 %v827
    %1407 = vmatpush.msra.mxu0 %v824
    %1408 = vmatpush.msra.mxu0 %v821
    %1409 = vmatpush.msra.mxu0 %v818
    %1410 = vmatpush.msra.mxu0 %v815
    %1411 = vmatpush.msra.mxu0 %v812
    %1412 = vmatpush.msra.mxu0 %v809
    %1413 = vmatpush.msra.mxu0 %v806
    %1414 = vmatpush.msra.mxu0 %v803
    %1415 = vmatpush.msra.mxu0 %v800
    %1416 = vmatpush.msra.mxu0 %v797
    %1417 = vmatpush.msra.mxu0 %v794
    %1418 = vmatpush.msra.mxu0 %v791
    %1419 = vmatpush.msra.mxu0 %v788
    %1420 = vmatpush.msra.mxu0 %v785
    %1421 = vmatmul.f32.gmra.mxu0 %v1401
    %v1422 = vpop.f32.mrf.mxu0
    %v1423 = vadd.f32 %v835, %v1422
    %1424 = vdwg.mxu0
    %1425 = vmatpush.msra.mxu0 %v831
    %1426 = vmatpush.msra.mxu0 %v828
    %1427 = vmatpush.msra.mxu0 %v825
    %1428 = vmatpush.msra.mxu0 %v822
    %1429 = vmatpush.msra.mxu0 %v819
    %1430 = vmatpush.msra.mxu0 %v816
    %1431 = vmatpush.msra.mxu0 %v813
    %1432 = vmatpush.msra.mxu0 %v810
    %1433 = vmatpush.msra.mxu0 %v807
    %1434 = vmatpush.msra.mxu0 %v804
    %1435 = vmatpush.msra.mxu0 %v801
    %1436 = vmatpush.msra.mxu0 %v798
    %1437 = vmatpush.msra.mxu0 %v795
    %1438 = vmatpush.msra.mxu0 %v792
    %1439 = vmatpush.msra.mxu0 %v789
    %1440 = vmatpush.msra.mxu0 %v786
    %1441 = vmatmul.f32.gmra.mxu0 %v1401
    %v1442 = vpop.f32.mrf.mxu0
    %v1443 = vadd.f32 %v836, %v1442
    %1444 = vdwg.mxu0
    %1445 = vmatpush.msra.mxu0 %v832
    %1446 = vmatpush.msra.mxu0 %v829
    %1447 = vmatpush.msra.mxu0 %v826
    %1448 = vmatpush.msra.mxu0 %v823
    %1449 = vmatpush.msra.mxu0 %v820
    %1450 = vmatpush.msra.mxu0 %v817
    %1451 = vmatpush.msra.mxu0 %v814
    %1452 = vmatpush.msra.mxu0 %v811
    %1453 = vmatpush.msra.mxu0 %v808
    %1454 = vmatpush.msra.mxu0 %v805
    %1455 = vmatpush.msra.mxu0 %v802
    %1456 = vmatpush.msra.mxu0 %v799
    %1457 = vmatpush.msra.mxu0 %v796
    %1458 = vmatpush.msra.mxu0 %v793
    %1459 = vmatpush.msra.mxu0 %v790
    %1460 = vmatpush.msra.mxu0 %v787
    %1461 = vmatmul.f32.gmra.mxu0 %v1401
    %v1462 = vpop.f32.mrf.mxu0
    %v1463 = vadd.f32 %v837, %v1462
    %1464 = vdwg.mxu0
    %v1465 = vadd.f32 %v1402, %v1423
    %v1466 = vxor.u32 %v1465, 2147483648
    %v1467 = vmul.f32 %v1466, 1.442695
    %v1468 = vpow.pop %v1467
    %v1469 = vadd.f32 %v1468, 1.0
    %v1470 = vrcp.pop %v1469
    %v1471 = vmul.f32 %v1469, %v1470
    %v1472 = vsub.f32 1.0, %v1471
    %v1473 = vmul.f32 %v1470, %v1472
    %v1474 = vadd.f32 %v1470, %v1473
    %vm1475 = vweird.f32 %v1469
    %vm1476 = vweird.f32 %v1470
    %vm1477 = vmor %vm1475, %vm1476
    %v1478 = vsel %vm1477, %v1470, %v1474
    %v1479 = vand.u32 2147483647, %v1469
    %vm1480 = vcmp.eq.f32.partialorder %v1479, 8.507059e+37
    %v1481 = vand.u32 %v1469, 2147483648
    %v1482 = vor.u32 1.1754944e-38, %v1481
    %v1483 = vsel %vm1480, %v1482, %v1478
    %v1484 = vmul.f32 1.0, %v1483
    %v1485 = vadd.f32 %v1403, %v1443
    %v1486 = vxor.u32 %v1485, 2147483648
    %v1487 = vmul.f32 %v1486, 1.442695
    %v1488 = vpow.pop %v1487
    %v1489 = vadd.f32 %v1488, 1.0
    %v1490 = vrcp.pop %v1489
    %v1491 = vmul.f32 %v1489, %v1490
    %v1492 = vsub.f32 1.0, %v1491
    %v1493 = vmul.f32 %v1490, %v1492
    %v1494 = vadd.f32 %v1490, %v1493
    %vm1495 = vweird.f32 %v1489
    %vm1496 = vweird.f32 %v1490
    %vm1497 = vmor %vm1495, %vm1496
    %v1498 = vsel %vm1497, %v1490, %v1494
    %v1499 = vand.u32 2147483647, %v1489
    %vm1500 = vcmp.eq.f32.partialorder %v1499, 8.507059e+37
    %v1501 = vand.u32 %v1489, 2147483648
    %v1502 = vor.u32 1.1754944e-38, %v1501
    %v1503 = vsel %vm1500, %v1502, %v1498
    %v1504 = vmul.f32 1.0, %v1503
    %v1505 = vmul.f32 %v1484, %v1463
    %v1506 = vadd.f32 %v1404, %v1505
    %v1507 = vtanh.pop %v1506
    %v1508 = vsub.f32 1.0, %v1504
    %v1509 = vmul.f32 %v1508, %v1507
    %v1510 = vmul.f32 %v1504, %v1401
    %v1511 = vadd.f32 %v1509, %v1510
    %vm1512 = vcmp.gt.s32.totalorder %v841, 5
    %v1513 = vsel %vm1512, %v1511, %v1401
    %v1514 = vld [vmem:[#allocation2 + $0x90] sm:$0xff]
    %v1515 = vld [vmem:[#allocation2 + $0x98] sm:$0xff]
    %v1516 = vld [vmem:[#allocation2 + $0xa0] sm:$0xff]
    %1517 = vmatpush.msra.mxu0 %v830
    %1518 = vmatpush.msra.mxu0 %v827
    %1519 = vmatpush.msra.mxu0 %v824
    %1520 = vmatpush.msra.mxu0 %v821
    %1521 = vmatpush.msra.mxu0 %v818
    %1522 = vmatpush.msra.mxu0 %v815
    %1523 = vmatpush.msra.mxu0 %v812
    %1524 = vmatpush.msra.mxu0 %v809
    %1525 = vmatpush.msra.mxu0 %v806
    %1526 = vmatpush.msra.mxu0 %v803
    %1527 = vmatpush.msra.mxu0 %v800
    %1528 = vmatpush.msra.mxu0 %v797
    %1529 = vmatpush.msra.mxu0 %v794
    %1530 = vmatpush.msra.mxu0 %v791
    %1531 = vmatpush.msra.mxu0 %v788
    %1532 = vmatpush.msra.mxu0 %v785
    %1533 = vmatmul.f32.gmra.mxu0 %v1513
    %v1534 = vpop.f32.mrf.mxu0
    %v1535 = vadd.f32 %v835, %v1534
    %1536 = vdwg.mxu0
    %1537 = vmatpush.msra.mxu0 %v831
    %1538 = vmatpush.msra.mxu0 %v828
    %1539 = vmatpush.msra.mxu0 %v825
    %1540 = vmatpush.msra.mxu0 %v822
    %1541 = vmatpush.msra.mxu0 %v819
    %1542 = vmatpush.msra.mxu0 %v816
    %1543 = vmatpush.msra.mxu0 %v813
    %1544 = vmatpush.msra.mxu0 %v810
    %1545 = vmatpush.msra.mxu0 %v807
    %1546 = vmatpush.msra.mxu0 %v804
    %1547 = vmatpush.msra.mxu0 %v801
    %1548 = vmatpush.msra.mxu0 %v798
    %1549 = vmatpush.msra.mxu0 %v795
    %1550 = vmatpush.msra.mxu0 %v792
    %1551 = vmatpush.msra.mxu0 %v789
    %1552 = vmatpush.msra.mxu0 %v786
    %1553 = vmatmul.f32.gmra.mxu0 %v1513
    %v1554 = vpop.f32.mrf.mxu0
    %v1555 = vadd.f32 %v836, %v1554
    %1556 = vdwg.mxu0
    %1557 = vmatpush.msra.mxu0 %v832
    %1558 = vmatpush.msra.mxu0 %v829
    %1559 = vmatpush.msra.mxu0 %v826
    %1560 = vmatpush.msra.mxu0 %v823
    %1561 = vmatpush.msra.mxu0 %v820
    %1562 = vmatpush.msra.mxu0 %v817
    %1563 = vmatpush.msra.mxu0 %v814
    %1564 = vmatpush.msra.mxu0 %v811
    %1565 = vmatpush.msra.mxu0 %v808
    %1566 = vmatpush.msra.mxu0 %v805
    %1567 = vmatpush.msra.mxu0 %v802
    %1568 = vmatpush.msra.mxu0 %v799
    %1569 = vmatpush.msra.mxu0 %v796
    %1570 = vmatpush.msra.mxu0 %v793
    %1571 = vmatpush.msra.mxu0 %v790
    %1572 = vmatpush.msra.mxu0 %v787
    %1573 = vmatmul.f32.gmra.mxu0 %v1513
    %v1574 = vpop.f32.mrf.mxu0
    %v1575 = vadd.f32 %v837, %v1574
    %1576 = vdwg.mxu0
    %v1577 = vadd.f32 %v1514, %v1535
    %v1578 = vxor.u32 %v1577, 2147483648
    %v1579 = vmul.f32 %v1578, 1.442695
    %v1580 = vpow.pop %v1579
    %v1581 = vadd.f32 %v1580, 1.0
    %v1582 = vrcp.pop %v1581
    %v1583 = vmul.f32 %v1581, %v1582
    %v1584 = vsub.f32 1.0, %v1583
    %v1585 = vmul.f32 %v1582, %v1584
    %v1586 = vadd.f32 %v1582, %v1585
    %vm1587 = vweird.f32 %v1581
    %vm1588 = vweird.f32 %v1582
    %vm1589 = vmor %vm1587, %vm1588
    %v1590 = vsel %vm1589, %v1582, %v1586
    %v1591 = vand.u32 2147483647, %v1581
    %vm1592 = vcmp.eq.f32.partialorder %v1591, 8.507059e+37
    %v1593 = vand.u32 %v1581, 2147483648
    %v1594 = vor.u32 1.1754944e-38, %v1593
    %v1595 = vsel %vm1592, %v1594, %v1590
    %v1596 = vmul.f32 1.0, %v1595
    %v1597 = vadd.f32 %v1515, %v1555
    %v1598 = vxor.u32 %v1597, 2147483648
    %v1599 = vmul.f32 %v1598, 1.442695
    %v1600 = vpow.pop %v1599
    %v1601 = vadd.f32 %v1600, 1.0
    %v1602 = vrcp.pop %v1601
    %v1603 = vmul.f32 %v1601, %v1602
    %v1604 = vsub.f32 1.0, %v1603
    %v1605 = vmul.f32 %v1602, %v1604
    %v1606 = vadd.f32 %v1602, %v1605
    %vm1607 = vweird.f32 %v1601
    %vm1608 = vweird.f32 %v1602
    %vm1609 = vmor %vm1607, %vm1608
    %v1610 = vsel %vm1609, %v1602, %v1606
    %v1611 = vand.u32 2147483647, %v1601
    %vm1612 = vcmp.eq.f32.partialorder %v1611, 8.507059e+37
    %v1613 = vand.u32 %v1601, 2147483648
    %v1614 = vor.u32 1.1754944e-38, %v1613
    %v1615 = vsel %vm1612, %v1614, %v1610
    %v1616 = vmul.f32 1.0, %v1615
    %v1617 = vmul.f32 %v1596, %v1575
    %v1618 = vadd.f32 %v1516, %v1617
    %v1619 = vtanh.pop %v1618
    %v1620 = vsub.f32 1.0, %v1616
    %v1621 = vmul.f32 %v1620, %v1619
    %v1622 = vmul.f32 %v1616, %v1513
    %v1623 = vadd.f32 %v1621, %v1622
    %vm1624 = vcmp.gt.s32.totalorder %v841, 6
    %v1625 = vsel %vm1624, %v1623, %v1513
    %v1626 = vld [vmem:[#allocation2 + $0xa8] sm:$0xff]
    %v1627 = vld [vmem:[#allocation2 + $0xb0] sm:$0xff]
    %v1628 = vld [vmem:[#allocation2 + $0xb8] sm:$0xff]
    %1629 = vmatpush.msra.mxu0 %v830
    %1630 = vmatpush.msra.mxu0 %v827
    %1631 = vmatpush.msra.mxu0 %v824
    %1632 = vmatpush.msra.mxu0 %v821
    %1633 = vmatpush.msra.mxu0 %v818
    %1634 = vmatpush.msra.mxu0 %v815
    %1635 = vmatpush.msra.mxu0 %v812
    %1636 = vmatpush.msra.mxu0 %v809
    %1637 = vmatpush.msra.mxu0 %v806
    %1638 = vmatpush.msra.mxu0 %v803
    %1639 = vmatpush.msra.mxu0 %v800
    %1640 = vmatpush.msra.mxu0 %v797
    %1641 = vmatpush.msra.mxu0 %v794
    %1642 = vmatpush.msra.mxu0 %v791
    %1643 = vmatpush.msra.mxu0 %v788
    %1644 = vmatpush.msra.mxu0 %v785
    %1645 = vmatmul.f32.gmra.mxu0 %v1625
    %v1646 = vpop.f32.mrf.mxu0
    %v1647 = vadd.f32 %v835, %v1646
    %1648 = vdwg.mxu0
    %1649 = vmatpush.msra.mxu0 %v831
    %1650 = vmatpush.msra.mxu0 %v828
    %1651 = vmatpush.msra.mxu0 %v825
    %1652 = vmatpush.msra.mxu0 %v822
    %1653 = vmatpush.msra.mxu0 %v819
    %1654 = vmatpush.msra.mxu0 %v816
    %1655 = vmatpush.msra.mxu0 %v813
    %1656 = vmatpush.msra.mxu0 %v810
    %1657 = vmatpush.msra.mxu0 %v807
    %1658 = vmatpush.msra.mxu0 %v804
    %1659 = vmatpush.msra.mxu0 %v801
    %1660 = vmatpush.msra.mxu0 %v798
    %1661 = vmatpush.msra.mxu0 %v795
    %1662 = vmatpush.msra.mxu0 %v792
    %1663 = vmatpush.msra.mxu0 %v789
    %1664 = vmatpush.msra.mxu0 %v786
    %1665 = vmatmul.f32.gmra.mxu0 %v1625
    %v1666 = vpop.f32.mrf.mxu0
    %v1667 = vadd.f32 %v836, %v1666
    %1668 = vdwg.mxu0
    %1669 = vmatpush.msra.mxu0 %v832
    %1670 = vmatpush.msra.mxu0 %v829
    %1671 = vmatpush.msra.mxu0 %v826
    %1672 = vmatpush.msra.mxu0 %v823
    %1673 = vmatpush.msra.mxu0 %v820
    %1674 = vmatpush.msra.mxu0 %v817
    %1675 = vmatpush.msra.mxu0 %v814
    %1676 = vmatpush.msra.mxu0 %v811
    %1677 = vmatpush.msra.mxu0 %v808
    %1678 = vmatpush.msra.mxu0 %v805
    %1679 = vmatpush.msra.mxu0 %v802
    %1680 = vmatpush.msra.mxu0 %v799
    %1681 = vmatpush.msra.mxu0 %v796
    %1682 = vmatpush.msra.mxu0 %v793
    %1683 = vmatpush.msra.mxu0 %v790
    %1684 = vmatpush.msra.mxu0 %v787
    %1685 = vmatmul.f32.gmra.mxu0 %v1625
    %v1686 = vpop.f32.mrf.mxu0
    %v1687 = vadd.f32 %v837, %v1686
    %1688 = vdwg.mxu0
    %v1689 = vadd.f32 %v1626, %v1647
    %v1690 = vxor.u32 %v1689, 2147483648
    %v1691 = vmul.f32 %v1690, 1.442695
    %v1692 = vpow.pop %v1691
    %v1693 = vadd.f32 %v1692, 1.0
    %v1694 = vrcp.pop %v1693
    %v1695 = vmul.f32 %v1693, %v1694
    %v1696 = vsub.f32 1.0, %v1695
    %v1697 = vmul.f32 %v1694, %v1696
    %v1698 = vadd.f32 %v1694, %v1697
    %vm1699 = vweird.f32 %v1693
    %vm1700 = vweird.f32 %v1694
    %vm1701 = vmor %vm1699, %vm1700
    %v1702 = vsel %vm1701, %v1694, %v1698
    %v1703 = vand.u32 2147483647, %v1693
    %vm1704 = vcmp.eq.f32.partialorder %v1703, 8.507059e+37
    %v1705 = vand.u32 %v1693, 2147483648
    %v1706 = vor.u32 1.1754944e-38, %v1705
    %v1707 = vsel %vm1704, %v1706, %v1702
    %v1708 = vmul.f32 1.0, %v1707
    %v1709 = vadd.f32 %v1627, %v1667
    %v1710 = vxor.u32 %v1709, 2147483648
    %v1711 = vmul.f32 %v1710, 1.442695
    %v1712 = vpow.pop %v1711
    %v1713 = vadd.f32 %v1712, 1.0
    %v1714 = vrcp.pop %v1713
    %v1715 = vmul.f32 %v1713, %v1714
    %v1716 = vsub.f32 1.0, %v1715
    %v1717 = vmul.f32 %v1714, %v1716
    %v1718 = vadd.f32 %v1714, %v1717
    %vm1719 = vweird.f32 %v1713
    %vm1720 = vweird.f32 %v1714
    %vm1721 = vmor %vm1719, %vm1720
    %v1722 = vsel %vm1721, %v1714, %v1718
    %v1723 = vand.u32 2147483647, %v1713
    %vm1724 = vcmp.eq.f32.partialorder %v1723, 8.507059e+37
    %v1725 = vand.u32 %v1713, 2147483648
    %v1726 = vor.u32 1.1754944e-38, %v1725
    %v1727 = vsel %vm1724, %v1726, %v1722
    %v1728 = vmul.f32 1.0, %v1727
    %v1729 = vmul.f32 %v1708, %v1687
    %v1730 = vadd.f32 %v1628, %v1729
    %v1731 = vtanh.pop %v1730
    %v1732 = vsub.f32 1.0, %v1728
    %v1733 = vmul.f32 %v1732, %v1731
    %v1734 = vmul.f32 %v1728, %v1625
    %v1735 = vadd.f32 %v1733, %v1734
    %vm1736 = vcmp.gt.s32.totalorder %v841, 7
    %v1737 = vsel %vm1736, %v1735, %v1625
    %v1738 = vld [vmem:[%s6] sm:$0xff]
    %v1739 = vld [vmem:[%s6 + $0x8] sm:$0xff]
    %v1740 = vld [vmem:[%s6 + $0x10] sm:$0xff]
    %v1741 = vld [vmem:[%s6 + $0x18] sm:$0xff]
    %v1742 = vld [vmem:[%s6 + $0x20] sm:$0xff]
    %v1743 = vld [vmem:[%s6 + $0x28] sm:$0xff]
    %v1744 = vld [vmem:[%s6 + $0x30] sm:$0xff]
    %v1745 = vld [vmem:[%s6 + $0x38] sm:$0xff]
    %v1746 = vld [vmem:[%s6 + $0x40] sm:$0xff]
    %v1747 = vld [vmem:[%s6 + $0x48] sm:$0xff]
    %v1748 = vld [vmem:[%s6 + $0x50] sm:$0xff]
    %v1749 = vld [vmem:[%s6 + $0x58] sm:$0xff]
    %v1750 = vld [vmem:[%s6 + $0x60] sm:$0xff]
    %v1751 = vld [vmem:[%s6 + $0x68] sm:$0xff]
    %v1752 = vld [vmem:[%s6 + $0x70] sm:$0xff]
    %v1753 = vld [vmem:[%s6 + $0x78] sm:$0xff]
    %1754 = vmatpush.msra.mxu0 %v1753
    %1755 = vmatpush.msra.mxu0 %v1752
    %1756 = vmatpush.msra.mxu0 %v1751
    %1757 = vmatpush.msra.mxu0 %v1750
    %1758 = vmatpush.msra.mxu0 %v1749
    %1759 = vmatpush.msra.mxu0 %v1748
    %1760 = vmatpush.msra.mxu0 %v1747
    %1761 = vmatpush.msra.mxu0 %v1746
    %1762 = vmatpush.msra.mxu0 %v1745
    %1763 = vmatpush.msra.mxu0 %v1744
    %1764 = vmatpush.msra.mxu0 %v1743
    %1765 = vmatpush.msra.mxu0 %v1742
    %1766 = vmatpush.msra.mxu0 %v1741
    %1767 = vmatpush.msra.mxu0 %v1740
    %1768 = vmatpush.msra.mxu0 %v1739
    %1769 = vmatpush.msra.mxu0 %v1738
    %1770 = vmatmul.f32.gmra.mxu0 %v1737
    %v1771 = vpop.f32.mrf.mxu0
    %v1772 = vadd.f32 0.0, %v1771
    %1773 = vdwg.mxu0
    %v1774 = vld [vmem:[%s2] sm:$0xff]
    %v1775 = vld [vmem:[%s7] sm:$0x1]
    %v1776 = vld [vmem:[%s7 + $0x1] sm:$0x1]
    %v1777 = vld [vmem:[%s7 + $0x2] sm:$0x1]
    %1779 = vrot.lane.b32.xlu0 %v1772, 96
    %v1780 = vpop.permute.xlu0 %1779
    %vm1782 = vcmask 64512
    %v1784 = vsel %vm1782, %v1774, 0
    %1786 = vmatpush.msra.mxu0 0.0
    %1787 = vmatpush.msra.mxu0 0.0
    %1788 = vmatpush.msra.mxu0 0.0
    %1789 = vmatpush.msra.mxu0 0.0
    %1790 = vmatpush.msra.mxu0 0.0
    %1791 = vmatpush.msra.mxu0 0.0
    %1792 = vmatpush.msra.mxu0 0.0
    %1793 = vmatpush.msra.mxu0 0.0
    %1794 = vmatpush.msra.mxu0 0.0
    %1795 = vmatpush.msra.mxu0 0.0
    %1796 = vmatpush.msra.mxu0 0.0
    %1797 = vmatpush.msra.mxu0 0.0
    %1798 = vmatpush.msra.mxu0 0.0
    %1799 = vmatpush.msra.mxu0 0.0
    %1800 = vmatpush.msra.mxu0 0.0
    %1801 = vmatpush.msra.mxu0 %v1772
    %1802 = vmatmul.f32.gmra.mxu0 %v1784
    %v1803 = vpop.f32.mrf.mxu0
    %v1804 = vadd.f32 %v1780, %v1803
    %1805 = vdwg.mxu0
    %v1806 = vperm.slane %v1775, 0
    %v1807 = vadd.f32 %v1804, %v1806
    %v1808 = vmax.f32 %v1807, 0.0
    %v1809 = vperm.slane %v1776, 0
    %v1810 = vmul.f32 %v1808, %v1809
    %vm1811 = vcmask 261120
    %v1812 = vsel %vm1811, %v1810, 0.0
    %1813 = vadd.xlane.f32.xlu0 %v1812
    %v1814 = vpop.xlane.xlu0 %1813
    %v1815 = vperm.slane %v1777, 0
    %v1816 = vadd.f32 %v1814, %v1815
    %vm1817 = vcmask 7168
    %1818 = vst.msk [vmem:[%s8] sm:$0xff] %vm1817, %v1816
    // Predicated region
    $region38: #{tpu_custom_call.1} parent=1 // pred_check
      _
    $region39: #{tpu_custom_call.1} parent=1 // pred_check_branch
      %1820 = sbr.rel (0) target = $region41
    $region40: #{tpu_custom_call.1} parent=1 // pred_region
      _
    $region41: #{tpu_custom_call.1} parent=1 // pred_fallthru
      _
    // Predicated region
    $region42: #{tpu_custom_call.1} parent=1 // pred_check
      _
    $region43: #{tpu_custom_call.1} parent=1 // pred_check_branch
      %1822 = sbr.rel (0) target = $region45
    $region44: #{tpu_custom_call.1} parent=1 // pred_region
      _
    $region45: #{tpu_custom_call.1} parent=1 // pred_fallthru
      _
    %1823 = vsyncpa [#allocation4], 1

</llo_original>
